<compile_context>
chip_gen: v5e
topology: v5e:2x2
jax: 0.10.0
libtpu: 0.0.40
codegen_flags: <defaults>
</compile_context>

<pallas_src>
import jax
import jax.numpy as jnp
import numpy as np
from jax.experimental import pallas as pl
from jax.experimental.pallas import tpu as pltpu


_VMEM_BUDGET_BYTES = 32 * 1024 * 1024   # pipelined working-set target (fits v7x)
_VMEM_LIMIT_BYTES = 48 * 1024 * 1024    # scoped-VMEM limit handed to Mosaic


def _interdomain_kernel(x_ref, y_ref, xc_ref, yc_ref,
                        wx_self_ref, wx_cross_ref, wy_self_ref, wy_cross_ref,
                        fx_ref, fy_ref):
    BB, Nx, Dx = x_ref.shape
    _, Ny, Dy = y_ref.shape

    x = x_ref[...]                      # (BB, Nx, Dx)
    y = y_ref[...]                      # (BB, Ny, Dy)
    xc = xc_ref[...]                    # (BB, 1, Nx)   lane-dense cosines
    yc = yc_ref[...]                    # (BB, 1, Ny)

    # Cosine-weighted node reduction on the MXU, batched over BB:
    #   (BB, 1, N) @ (BB, N, D) -> (BB, D), accumulated in f32.
    x_sum = jnp.einsum('bkn,bnd->bkd', xc, x,
                       preferred_element_type=jnp.float32)[:, 0, :]    # (BB, Dx)
    y_sum = jnp.einsum('bkn,bnd->bkd', yc, y,
                       preferred_element_type=jnp.float32)[:, 0, :]    # (BB, Dy)

    # Self projection: one big matmul over all BB*N rows of the block.
    fx_main = jnp.dot(x.reshape(BB * Nx, Dx), wx_self_ref[...],
                      preferred_element_type=jnp.float32)              # (BB*Nx, Dx)
    fy_main = jnp.dot(y.reshape(BB * Ny, Dy), wy_self_ref[...],
                      preferred_element_type=jnp.float32)              # (BB*Ny, Dy)

    # Cross projection: batched rank-1 terms as one (BB, D) @ (D, Dout) matmul.
    # Cast the f32 sums down to the weight dtype so the bf16 path stays on the
    # native MXU mode (no-op for f32).
    w_dtype = wx_cross_ref.dtype
    fx_cross = jnp.dot(y_sum.astype(w_dtype), wx_cross_ref[...],
                       preferred_element_type=jnp.float32)             # (BB, Dx)
    fy_cross = jnp.dot(x_sum.astype(w_dtype), wy_cross_ref[...],
                       preferred_element_type=jnp.float32)             # (BB, Dy)

    fx = fx_main.reshape(BB, Nx, Dx) + fx_cross[:, None, :]
    fy = fy_main.reshape(BB, Ny, Dy) + fy_cross[:, None, :]

    fx_ref[...] = fx.astype(fx_ref.dtype)
    fy_ref[...] = fy.astype(fy_ref.dtype)


def _cdiv(a, b):
    return -(-a // b)


def _round_up(v, m):
    return _cdiv(v, m) * m


def _pad_to(a, shape):
    pads = [(0, t - s) for s, t in zip(a.shape, shape)]
    if all(p == (0, 0) for p in pads):
        return a
    return jnp.pad(a, pads)


def _choose_blocking(B, rows_per_batch, per_batch_bytes, weight_bytes, budget):
    """VMEM-aware choice of (batches per grid step, number of grid steps)."""
    avail = budget - weight_bytes
    if avail < per_batch_bytes:
        # TODO(synk): add an N-tiling path (grid over node tiles with a VMEM
        # scratch accumulator for the cosine sums) for shapes where even a
        # single batch exceeds the VMEM budget; for now fall back to bb=1.
        cap_bb = 1
    else:
        cap_bb = avail // per_batch_bytes
    # Target ~512-1024 MXU rows per step (roofline-friendly DMA tile size).
    target_bb = max(1, _cdiv(1024, rows_per_batch))
    bb = int(max(1, min(B, cap_bb, target_bb)))
    # Keep >= 2 grid steps whenever possible so v7x's two TensorCores both get
    # work on the "parallel" batch axis (per-step overhead is only ~0.35 us).
    if bb >= B and B >= 2:
        bb = _cdiv(B, 2)
    n_steps = _cdiv(B, bb)
    # Prefer an even step count (v7x TC sharding) when it adds no extra padding.
    if n_steps > 1 and n_steps % 2 == 1:
        cur_pad = n_steps * bb - B
        for cand in range(bb - 1, 0, -1):
            s = _cdiv(B, cand)
            if s % 2 == 0 and s * cand - B <= cur_pad:
                bb, n_steps = cand, s
                break
    return bb, n_steps


def _weight_spec(shape, single_buffer):
    index_map = lambda b: (0, 0)
    if single_buffer:
        # Grid-invariant input: a single VMEM buffer is enough (saves the
        # second double-buffer copy of each weight matrix).
        return pl.BlockSpec(shape, index_map, pipeline_mode=pl.Buffered(1))
    return pl.BlockSpec(shape, index_map)


def interdomain_forward(x, y, x_cos, y_cos, Wx, Wy, compute_dtype=None):
    """Pallas implementation of InterDomain.forward.

    x: (B, Nx, Dx), y: (B, Ny, Dy), x_cos: (B, Nx, 1) or (B, Nx),
    y_cos: (B, Ny, 1) or (B, Ny), Wx: (Dx+Dy, Dx), Wy: (Dx+Dy, Dy).
    compute_dtype: dtype used for HBM I/O and MXU operands (accumulation is
      always f32). bf16 roughly halves HBM traffic for this memory-bound op.
    Returns (final_x: (B, Nx, Dx), final_y: (B, Ny, Dy)) in compute_dtype.
    """
    B, Nx, Dx = x.shape
    _, Ny, Dy = y.shape
    cdt = jnp.dtype(compute_dtype) if compute_dtype is not None else jnp.dtype(x.dtype)
    itemsize = cdt.itemsize

    # Lane-dense cosine weights: (B, N, 1) / (B, N) -> (B, 1, N).
    xc = jnp.reshape(x_cos, (B, 1, Nx)).astype(cdt)
    yc = jnp.reshape(y_cos, (B, 1, Ny)).astype(cdt)

    # Split the weights at the concat boundary (once, outside the kernel).
    Wx_self, Wx_cross = Wx[:Dx].astype(cdt), Wx[Dx:].astype(cdt)   # (Dx,Dx),(Dy,Dx)
    Wy_self, Wy_cross = Wy[:Dy].astype(cdt), Wy[Dy:].astype(cdt)   # (Dy,Dy),(Dx,Dy)

    # Pad node axes to multiples of 16 (layout-preserving reshape for both f32
    # and bf16 sublane packing) and feature axes to multiples of 128 (lane-dense
    # unmasked stores). Padded node rows carry cos == 0 and padded feature
    # columns/weights are zero, so results are unaffected; padding is sliced
    # off after the call.
    Nx_p, Ny_p = _round_up(Nx, 16), _round_up(Ny, 16)
    Dx_p, Dy_p = _round_up(Dx, 128), _round_up(Dy, 128)

    x_p = _pad_to(x.astype(cdt), (B, Nx_p, Dx_p))
    y_p = _pad_to(y.astype(cdt), (B, Ny_p, Dy_p))
    xc_p = _pad_to(xc, (B, 1, Nx_p))
    yc_p = _pad_to(yc, (B, 1, Ny_p))
    wxs = _pad_to(Wx_self, (Dx_p, Dx_p))
    wxc = _pad_to(Wx_cross, (Dy_p, Dx_p))
    wys = _pad_to(Wy_self, (Dy_p, Dy_p))
    wyc = _pad_to(Wy_cross, (Dx_p, Dy_p))

    # VMEM-aware batch blocking. Inputs and outputs are double-buffered by the
    # pipeline; weights counted twice to stay conservative even if the
    # single-buffer fallback is taken.
    per_batch_bytes = (2 * (Nx_p * Dx_p + Ny_p * Dy_p + Nx_p + Ny_p)
                       + 2 * (Nx_p * Dx_p + Ny_p * Dy_p)) * itemsize
    weight_bytes = 2 * (Dx_p * Dx_p + Dy_p * Dx_p
                        + Dy_p * Dy_p + Dx_p * Dy_p) * itemsize
    bb, n_steps = _choose_blocking(B, max(Nx_p, Ny_p), per_batch_bytes,
                                   weight_bytes, _VMEM_BUDGET_BYTES)

    Bp = n_steps * bb
    x_p = _pad_to(x_p, (Bp, Nx_p, Dx_p))
    y_p = _pad_to(y_p, (Bp, Ny_p, Dy_p))
    xc_p = _pad_to(xc_p, (Bp, 1, Nx_p))
    yc_p = _pad_to(yc_p, (Bp, 1, Ny_p))

    def _run(single_buffer_weights):
        return pl.pallas_call(
            _interdomain_kernel,
            out_shape=(
                jax.ShapeDtypeStruct((Bp, Nx_p, Dx_p), cdt),
                jax.ShapeDtypeStruct((Bp, Ny_p, Dy_p), cdt),
            ),
            grid_spec=pltpu.PrefetchScalarGridSpec(
                num_scalar_prefetch=0,
                grid=(n_steps,),
                in_specs=[
                    pl.BlockSpec((bb, Nx_p, Dx_p), lambda b: (b, 0, 0)),
                    pl.BlockSpec((bb, Ny_p, Dy_p), lambda b: (b, 0, 0)),
                    pl.BlockSpec((bb, 1, Nx_p), lambda b: (b, 0, 0)),
                    pl.BlockSpec((bb, 1, Ny_p), lambda b: (b, 0, 0)),
                    _weight_spec((Dx_p, Dx_p), single_buffer_weights),
                    _weight_spec((Dy_p, Dx_p), single_buffer_weights),
                    _weight_spec((Dy_p, Dy_p), single_buffer_weights),
                    _weight_spec((Dx_p, Dy_p), single_buffer_weights),
                ],
                out_specs=[
                    pl.BlockSpec((bb, Nx_p, Dx_p), lambda b: (b, 0, 0)),
                    pl.BlockSpec((bb, Ny_p, Dy_p), lambda b: (b, 0, 0)),
                ],
            ),
            compiler_params=pltpu.CompilerParams(
                dimension_semantics=("parallel",),
                vmem_limit_bytes=_VMEM_LIMIT_BYTES),
        )(x_p, y_p, xc_p, yc_p, wxs, wxc, wys, wyc)

    try:
        fx, fy = _run(True)
    except Exception:
        # Fallback for jax builds that reject pipeline_mode=pl.Buffered(1);
        # identical semantics, just double-buffers the (small) weight tiles.
        fx, fy = _run(False)

    return fx[:B, :Nx, :Dx], fy[:B, :Ny, :Dy]


def _xavier_normal(key, shape, gain):
    # Matches torch.nn.init.xavier_normal_ for a 2-D (fan_out, fan_in) tensor.
    fan_out, fan_in = shape
    std = gain * np.sqrt(2.0 / (fan_in + fan_out))
    return jax.random.normal(key, shape, dtype=jnp.float32) * std


def _reference(x, y, x_cos, y_cos, Wx, Wy):
    B, Nx, Dx = x.shape
    _, Ny, Dy = y.shape
    x_cos = jnp.reshape(x_cos, (B, Nx, 1))
    y_cos = jnp.reshape(y_cos, (B, Ny, 1))
    x_mul_cos = jnp.sum(x * x_cos, axis=1)   # (B, Dx)
    y_mul_cos = jnp.sum(y * y_cos, axis=1)   # (B, Dy)
    updated_x = jnp.concatenate(
        [x, jnp.broadcast_to(y_mul_cos[:, None, :], (B, Nx, Dy))], axis=-1)
    updated_y = jnp.concatenate(
        [y, jnp.broadcast_to(x_mul_cos[:, None, :], (B, Ny, Dx))], axis=-1)
    return jnp.matmul(updated_x, Wx), jnp.matmul(updated_y, Wy)


if __name__ == "__main__":
    gain = np.sqrt(2.0)

    # ---- Case 1: spec-like shapes (docstring B*16*D), f32, tight check ----
    B, Nx, Ny, Dx, Dy = 2, 16, 16, 128, 128
    key = jax.random.PRNGKey(0)
    kx, ky, kxc, kyc, kwx, kwy, k2 = jax.random.split(key, 7)

    x = jax.random.normal(kx, (B, Nx, Dx), dtype=jnp.float32)
    y = jax.random.normal(ky, (B, Ny, Dy), dtype=jnp.float32)
    x_cos = jax.random.uniform(kxc, (B, Nx, 1), dtype=jnp.float32,
                               minval=-1.0, maxval=1.0)
    y_cos = jax.random.uniform(kyc, (B, Ny, 1), dtype=jnp.float32,
                               minval=-1.0, maxval=1.0)
    Wx = _xavier_normal(kwx, (Dx + Dy, Dx), gain)
    Wy = _xavier_normal(kwy, (Dx + Dy, Dy), gain)

    fx, fy = interdomain_forward(x, y, x_cos, y_cos, Wx, Wy)
    jax.block_until_ready((fx, fy))
    ref_x, ref_y = _reference(x, y, x_cos, y_cos, Wx, Wy)
    np.testing.assert_allclose(np.asarray(fx), np.asarray(ref_x), rtol=1e-4, atol=1e-4)
    np.testing.assert_allclose(np.asarray(fy), np.asarray(ref_y), rtol=1e-4, atol=1e-4)

    # ---- Case 2: bf16 I/O path (bandwidth-optimized), loose check ----
    fxb, fyb = interdomain_forward(x, y, x_cos, y_cos, Wx, Wy,
                                   compute_dtype=jnp.bfloat16)
    jax.block_until_ready((fxb, fyb))

    def _b(a):
        return a.astype(jnp.bfloat16).astype(jnp.float32)

    refb_x, refb_y = _reference(_b(x), _b(y), _b(x_cos), _b(y_cos), _b(Wx), _b(Wy))
    np.testing.assert_allclose(np.asarray(fxb.astype(jnp.float32)),
                               np.asarray(refb_x), rtol=5e-2, atol=1.5e-1)
    np.testing.assert_allclose(np.asarray(fyb.astype(jnp.float32)),
                               np.asarray(refb_y), rtol=5e-2, atol=1.5e-1)

    # ---- Case 3: irregular shapes (exercises N/D/batch padding), f32 ----
    B3, Nx3, Ny3, Dx3, Dy3 = 3, 10, 12, 96, 64
    k3 = jax.random.split(k2, 6)
    x3 = jax.random.normal(k3[0], (B3, Nx3, Dx3), dtype=jnp.float32)
    y3 = jax.random.normal(k3[1], (B3, Ny3, Dy3), dtype=jnp.float32)
    x3_cos = jax.random.uniform(k3[2], (B3, Nx3, 1), dtype=jnp.float32,
                                minval=-1.0, maxval=1.0)
    y3_cos = jax.random.uniform(k3[3], (B3, Ny3, 1), dtype=jnp.float32,
                                minval=-1.0, maxval=1.0)
    Wx3 = _xavier_normal(k3[4], (Dx3 + Dy3, Dx3), gain)
    Wy3 = _xavier_normal(k3[5], (Dx3 + Dy3, Dy3), gain)

    fx3, fy3 = interdomain_forward(x3, y3, x3_cos, y3_cos, Wx3, Wy3)
    jax.block_until_ready((fx3, fy3))
    ref3_x, ref3_y = _reference(x3, y3, x3_cos, y3_cos, Wx3, Wy3)
    np.testing.assert_allclose(np.asarray(fx3), np.asarray(ref3_x), rtol=1e-4, atol=1e-4)
    np.testing.assert_allclose(np.asarray(fy3), np.asarray(ref3_y), rtol=1e-4, atol=1e-4)

    print("KERNEL_OK")
</pallas_src>

<mosaic_0001>
module attributes {stable_mosaic.version = 11 : i64} {
  func.func @_interdomain_kernel(%arg0: i32, %arg1: memref<1x16x128xf32, #tpu.memory_space<vmem>>, %arg2: memref<1x16x128xf32, #tpu.memory_space<vmem>>, %arg3: memref<1x1x16xf32, #tpu.memory_space<vmem>>, %arg4: memref<1x1x16xf32, #tpu.memory_space<vmem>>, %arg5: memref<128x128xf32, #tpu.memory_space<vmem>>, %arg6: memref<128x128xf32, #tpu.memory_space<vmem>>, %arg7: memref<128x128xf32, #tpu.memory_space<vmem>>, %arg8: memref<128x128xf32, #tpu.memory_space<vmem>>, %arg9: memref<1x16x128xf32, #tpu.memory_space<vmem>>, %arg10: memref<1x16x128xf32, #tpu.memory_space<vmem>>) attributes {dimension_semantics = [#tpu.dimension_semantics<parallel>], iteration_bounds = array<i64: 2>, scalar_prefetch = 0 : i64, scratch_operands = 0 : i64, tpu.core_type = #tpu.core_type<tc>, window_params = [{transform_indices = @transform_0, window_bounds = array<i64: 1, 16, 128>}, {transform_indices = @transform_1, window_bounds = array<i64: 1, 16, 128>}, {transform_indices = @transform_2, window_bounds = array<i64: 1, 1, 16>}, {transform_indices = @transform_3, window_bounds = array<i64: 1, 1, 16>}, {pipeline_mode = #tpu.pipeline_mode<synchronous>, transform_indices = @transform_4, window_bounds = array<i64: 128, 128>}, {pipeline_mode = #tpu.pipeline_mode<synchronous>, transform_indices = @transform_5, window_bounds = array<i64: 128, 128>}, {pipeline_mode = #tpu.pipeline_mode<synchronous>, transform_indices = @transform_6, window_bounds = array<i64: 128, 128>}, {pipeline_mode = #tpu.pipeline_mode<synchronous>, transform_indices = @transform_7, window_bounds = array<i64: 128, 128>}, {transform_indices = @transform_8, window_bounds = array<i64: 1, 16, 128>}, {transform_indices = @transform_9, window_bounds = array<i64: 1, 16, 128>}]} {
    %c0 = arith.constant 0 : index
    %c0_0 = arith.constant 0 : index
    %c0_1 = arith.constant 0 : index
    %0 = vector.load %arg1[%c0, %c0_0, %c0_1] : memref<1x16x128xf32, #tpu.memory_space<vmem>>, vector<1x16x128xf32>
    %c0_2 = arith.constant 0 : index
    %c0_3 = arith.constant 0 : index
    %c0_4 = arith.constant 0 : index
    %1 = vector.load %arg2[%c0_2, %c0_3, %c0_4] : memref<1x16x128xf32, #tpu.memory_space<vmem>>, vector<1x16x128xf32>
    %c0_5 = arith.constant 0 : index
    %c0_6 = arith.constant 0 : index
    %c0_7 = arith.constant 0 : index
    %2 = vector.load %arg3[%c0_5, %c0_6, %c0_7] : memref<1x1x16xf32, #tpu.memory_space<vmem>>, vector<1x1x16xf32>
    %c0_8 = arith.constant 0 : index
    %c0_9 = arith.constant 0 : index
    %c0_10 = arith.constant 0 : index
    %3 = vector.load %arg4[%c0_8, %c0_9, %c0_10] : memref<1x1x16xf32, #tpu.memory_space<vmem>>, vector<1x1x16xf32>
    "tpu.trace_start"() <{level = 10 : i32, message = "bkn,bnd->bkd"}> : () -> ()
    %cst = arith.constant dense<0.000000e+00> : vector<1x1x128xf32>
    %4 = tpu.matmul %2, %0, %cst {dimension_numbers = #tpu.dot_dimension_numbers<[2], [1], [1], [2], [0, 0, 0, 1, 1, 2], [0], [0]>} : vector<1x1x16xf32>, vector<1x16x128xf32>, vector<1x1x128xf32> -> vector<1x1x128xf32>
    "tpu.trace_stop"() : () -> ()
    %5 = vector.shape_cast %4 : vector<1x1x128xf32> to vector<1x128xf32>
    "tpu.trace_start"() <{level = 10 : i32, message = "bkn,bnd->bkd"}> : () -> ()
    %cst_11 = arith.constant dense<0.000000e+00> : vector<1x1x128xf32>
    %6 = tpu.matmul %3, %1, %cst_11 {dimension_numbers = #tpu.dot_dimension_numbers<[2], [1], [1], [2], [0, 0, 0, 1, 1, 2], [0], [0]>} : vector<1x1x16xf32>, vector<1x16x128xf32>, vector<1x1x128xf32> -> vector<1x1x128xf32>
    "tpu.trace_stop"() : () -> ()
    %7 = vector.shape_cast %6 : vector<1x1x128xf32> to vector<1x128xf32>
    %8 = vector.shape_cast %0 : vector<1x16x128xf32> to vector<16x128xf32>
    %c0_12 = arith.constant 0 : index
    %c0_13 = arith.constant 0 : index
    %9 = vector.load %arg5[%c0_12, %c0_13] : memref<128x128xf32, #tpu.memory_space<vmem>>, vector<128x128xf32>
    %cst_14 = arith.constant dense<0.000000e+00> : vector<16x128xf32>
    %10 = tpu.matmul %8, %9, %cst_14 {dimension_numbers = #tpu.dot_dimension_numbers<[1], [0], [0], [1], [0, 0, 1, 1], [], []>} : vector<16x128xf32>, vector<128x128xf32>, vector<16x128xf32> -> vector<16x128xf32>
    %11 = vector.shape_cast %1 : vector<1x16x128xf32> to vector<16x128xf32>
    %c0_15 = arith.constant 0 : index
    %c0_16 = arith.constant 0 : index
    %12 = vector.load %arg7[%c0_15, %c0_16] : memref<128x128xf32, #tpu.memory_space<vmem>>, vector<128x128xf32>
    %cst_17 = arith.constant dense<0.000000e+00> : vector<16x128xf32>
    %13 = tpu.matmul %11, %12, %cst_17 {dimension_numbers = #tpu.dot_dimension_numbers<[1], [0], [0], [1], [0, 0, 1, 1], [], []>} : vector<16x128xf32>, vector<128x128xf32>, vector<16x128xf32> -> vector<16x128xf32>
    %c0_18 = arith.constant 0 : index
    %c0_19 = arith.constant 0 : index
    %14 = vector.load %arg6[%c0_18, %c0_19] : memref<128x128xf32, #tpu.memory_space<vmem>>, vector<128x128xf32>
    %cst_20 = arith.constant dense<0.000000e+00> : vector<1x128xf32>
    %15 = tpu.matmul %7, %14, %cst_20 {dimension_numbers = #tpu.dot_dimension_numbers<[1], [0], [0], [1], [0, 0, 1, 1], [], []>} : vector<1x128xf32>, vector<128x128xf32>, vector<1x128xf32> -> vector<1x128xf32>
    %c0_21 = arith.constant 0 : index
    %c0_22 = arith.constant 0 : index
    %16 = vector.load %arg8[%c0_21, %c0_22] : memref<128x128xf32, #tpu.memory_space<vmem>>, vector<128x128xf32>
    %cst_23 = arith.constant dense<0.000000e+00> : vector<1x128xf32>
    %17 = tpu.matmul %5, %16, %cst_23 {dimension_numbers = #tpu.dot_dimension_numbers<[1], [0], [0], [1], [0, 0, 1, 1], [], []>} : vector<1x128xf32>, vector<128x128xf32>, vector<1x128xf32> -> vector<1x128xf32>
    %18 = vector.shape_cast %10 : vector<16x128xf32> to vector<1x16x128xf32>
    %19 = vector.shape_cast %15 : vector<1x128xf32> to vector<1x1x128xf32>
    %20 = vector.broadcast %19 : vector<1x1x128xf32> to vector<1x16x128xf32>
    %21 = arith.addf %18, %20 : vector<1x16x128xf32>
    %22 = vector.shape_cast %13 : vector<16x128xf32> to vector<1x16x128xf32>
    %23 = vector.shape_cast %17 : vector<1x128xf32> to vector<1x1x128xf32>
    %24 = vector.broadcast %23 : vector<1x1x128xf32> to vector<1x16x128xf32>
    %25 = arith.addf %22, %24 : vector<1x16x128xf32>
    %c0_24 = arith.constant 0 : index
    %c0_25 = arith.constant 0 : index
    %c0_26 = arith.constant 0 : index
    %26 = vector.load %arg9[%c0_24, %c0_25, %c0_26] : memref<1x16x128xf32, #tpu.memory_space<vmem>>, vector<1x16x128xf32>
    tpu.vector_store %arg9[%c0_24, %c0_25, %c0_26], %21 {strides = array<i32>} : memref<1x16x128xf32, #tpu.memory_space<vmem>>, vector<1x16x128xf32>,
    %c0_27 = arith.constant 0 : index
    %c0_28 = arith.constant 0 : index
    %c0_29 = arith.constant 0 : index
    %27 = vector.load %arg10[%c0_27, %c0_28, %c0_29] : memref<1x16x128xf32, #tpu.memory_space<vmem>>, vector<1x16x128xf32>
    tpu.vector_store %arg10[%c0_27, %c0_28, %c0_29], %25 {strides = array<i32>} : memref<1x16x128xf32, #tpu.memory_space<vmem>>, vector<1x16x128xf32>,
    return
  }
  func.func @transform_0(%arg0: i32) -> (i32, i32, i32) {
    %c0_i32 = arith.constant 0 : i32
    %c0_i32_0 = arith.constant 0 : i32
    %c0_i32_1 = arith.constant 0 : i32
    return %arg0, %c0_i32, %c0_i32_0 : i32, i32, i32
  }
  func.func @transform_1(%arg0: i32) -> (i32, i32, i32) {
    %c0_i32 = arith.constant 0 : i32
    %c0_i32_0 = arith.constant 0 : i32
    %c0_i32_1 = arith.constant 0 : i32
    return %arg0, %c0_i32, %c0_i32_0 : i32, i32, i32
  }
  func.func @transform_2(%arg0: i32) -> (i32, i32, i32) {
    %c0_i32 = arith.constant 0 : i32
    %c0_i32_0 = arith.constant 0 : i32
    %c0_i32_1 = arith.constant 0 : i32
    return %arg0, %c0_i32, %c0_i32_0 : i32, i32, i32
  }
  func.func @transform_3(%arg0: i32) -> (i32, i32, i32) {
    %c0_i32 = arith.constant 0 : i32
    %c0_i32_0 = arith.constant 0 : i32
    %c0_i32_1 = arith.constant 0 : i32
    return %arg0, %c0_i32, %c0_i32_0 : i32, i32, i32
  }
  func.func @transform_4(%arg0: i32) -> (i32, i32) {
    %c0_i32 = arith.constant 0 : i32
    %c0_i32_0 = arith.constant 0 : i32
    %c0_i32_1 = arith.constant 0 : i32
    return %c0_i32, %c0_i32_0 : i32, i32
  }
  func.func @transform_5(%arg0: i32) -> (i32, i32) {
    %c0_i32 = arith.constant 0 : i32
    %c0_i32_0 = arith.constant 0 : i32
    %c0_i32_1 = arith.constant 0 : i32
    return %c0_i32, %c0_i32_0 : i32, i32
  }
  func.func @transform_6(%arg0: i32) -> (i32, i32) {
    %c0_i32 = arith.constant 0 : i32
    %c0_i32_0 = arith.constant 0 : i32
    %c0_i32_1 = arith.constant 0 : i32
    return %c0_i32, %c0_i32_0 : i32, i32
  }
  func.func @transform_7(%arg0: i32) -> (i32, i32) {
    %c0_i32 = arith.constant 0 : i32
    %c0_i32_0 = arith.constant 0 : i32
    %c0_i32_1 = arith.constant 0 : i32
    return %c0_i32, %c0_i32_0 : i32, i32
  }
  func.func @transform_8(%arg0: i32) -> (i32, i32, i32) {
    %c0_i32 = arith.constant 0 : i32
    %c0_i32_0 = arith.constant 0 : i32
    %c0_i32_1 = arith.constant 0 : i32
    return %arg0, %c0_i32, %c0_i32_0 : i32, i32, i32
  }
  func.func @transform_9(%arg0: i32) -> (i32, i32, i32) {
    %c0_i32 = arith.constant 0 : i32
    %c0_i32_0 = arith.constant 0 : i32
    %c0_i32_1 = arith.constant 0 : i32
    return %arg0, %c0_i32, %c0_i32_0 : i32, i32, i32
  }
}

module attributes {stable_mosaic.version = 11 : i64} {
  func.func @_interdomain_kernel(%arg0: i32, %arg1: memref<1x16x128xf32, #tpu.memory_space<vmem>>, %arg2: memref<1x16x128xf32, #tpu.memory_space<vmem>>, %arg3: memref<1x1x16xf32, #tpu.memory_space<vmem>>, %arg4: memref<1x1x16xf32, #tpu.memory_space<vmem>>, %arg5: memref<128x128xf32, #tpu.memory_space<vmem>>, %arg6: memref<128x128xf32, #tpu.memory_space<vmem>>, %arg7: memref<128x128xf32, #tpu.memory_space<vmem>>, %arg8: memref<128x128xf32, #tpu.memory_space<vmem>>, %arg9: memref<1x16x128xf32, #tpu.memory_space<vmem>>, %arg10: memref<1x16x128xf32, #tpu.memory_space<vmem>>) attributes {dimension_semantics = [#tpu.dimension_semantics<parallel>], iteration_bounds = array<i64: 2>, scalar_prefetch = 0 : i64, scratch_operands = 0 : i64, tpu.core_type = #tpu.core_type<tc>, window_params = [{transform_indices = @transform_0, window_bounds = array<i64: 1, 16, 128>}, {transform_indices = @transform_1, window_bounds = array<i64: 1, 16, 128>}, {transform_indices = @transform_2, window_bounds = array<i64: 1, 1, 16>}, {transform_indices = @transform_3, window_bounds = array<i64: 1, 1, 16>}, {pipeline_mode = #tpu.pipeline_mode<synchronous>, transform_indices = @transform_4, window_bounds = array<i64: 128, 128>}, {pipeline_mode = #tpu.pipeline_mode<synchronous>, transform_indices = @transform_5, window_bounds = array<i64: 128, 128>}, {pipeline_mode = #tpu.pipeline_mode<synchronous>, transform_indices = @transform_6, window_bounds = array<i64: 128, 128>}, {pipeline_mode = #tpu.pipeline_mode<synchronous>, transform_indices = @transform_7, window_bounds = array<i64: 128, 128>}, {transform_indices = @transform_8, window_bounds = array<i64: 1, 16, 128>}, {transform_indices = @transform_9, window_bounds = array<i64: 1, 16, 128>}]} {
    %c0 = arith.constant 0 : index
    %c0_0 = arith.constant 0 : index
    %c0_1 = arith.constant 0 : index
    %0 = vector.load %arg1[%c0, %c0_0, %c0_1] : memref<1x16x128xf32, #tpu.memory_space<vmem>>, vector<1x16x128xf32>
    %c0_2 = arith.constant 0 : index
    %c0_3 = arith.constant 0 : index
    %c0_4 = arith.constant 0 : index
    %1 = vector.load %arg2[%c0_2, %c0_3, %c0_4] : memref<1x16x128xf32, #tpu.memory_space<vmem>>, vector<1x16x128xf32>
    %c0_5 = arith.constant 0 : index
    %c0_6 = arith.constant 0 : index
    %c0_7 = arith.constant 0 : index
    %2 = vector.load %arg3[%c0_5, %c0_6, %c0_7] : memref<1x1x16xf32, #tpu.memory_space<vmem>>, vector<1x1x16xf32>
    %c0_8 = arith.constant 0 : index
    %c0_9 = arith.constant 0 : index
    %c0_10 = arith.constant 0 : index
    %3 = vector.load %arg4[%c0_8, %c0_9, %c0_10] : memref<1x1x16xf32, #tpu.memory_space<vmem>>, vector<1x1x16xf32>
    "tpu.trace_start"() <{level = 10 : i32, message = "bkn,bnd->bkd"}> : () -> ()
    %cst = arith.constant dense<0.000000e+00> : vector<1x1x128xf32>
    %4 = tpu.matmul %2, %0, %cst {dimension_numbers = #tpu.dot_dimension_numbers<[2], [1], [1], [2], [0, 0, 0, 1, 1, 2], [0], [0]>} : vector<1x1x16xf32>, vector<1x16x128xf32>, vector<1x1x128xf32> -> vector<1x1x128xf32>
    "tpu.trace_stop"() : () -> ()
    %5 = vector.shape_cast %4 : vector<1x1x128xf32> to vector<1x128xf32>
    "tpu.trace_start"() <{level = 10 : i32, message = "bkn,bnd->bkd"}> : () -> ()
    %cst_11 = arith.constant dense<0.000000e+00> : vector<1x1x128xf32>
    %6 = tpu.matmul %3, %1, %cst_11 {dimension_numbers = #tpu.dot_dimension_numbers<[2], [1], [1], [2], [0, 0, 0, 1, 1, 2], [0], [0]>} : vector<1x1x16xf32>, vector<1x16x128xf32>, vector<1x1x128xf32> -> vector<1x1x128xf32>
    "tpu.trace_stop"() : () -> ()
    %7 = vector.shape_cast %6 : vector<1x1x128xf32> to vector<1x128xf32>
    %8 = vector.shape_cast %0 : vector<1x16x128xf32> to vector<16x128xf32>
    %c0_12 = arith.constant 0 : index
    %c0_13 = arith.constant 0 : index
    %9 = vector.load %arg5[%c0_12, %c0_13] : memref<128x128xf32, #tpu.memory_space<vmem>>, vector<128x128xf32>
    %cst_14 = arith.constant dense<0.000000e+00> : vector<16x128xf32>
    %10 = tpu.matmul %8, %9, %cst_14 {dimension_numbers = #tpu.dot_dimension_numbers<[1], [0], [0], [1], [0, 0, 1, 1], [], []>} : vector<16x128xf32>, vector<128x128xf32>, vector<16x128xf32> -> vector<16x128xf32>
    %11 = vector.shape_cast %1 : vector<1x16x128xf32> to vector<16x128xf32>
    %c0_15 = arith.constant 0 : index
    %c0_16 = arith.constant 0 : index
    %12 = vector.load %arg7[%c0_15, %c0_16] : memref<128x128xf32, #tpu.memory_space<vmem>>, vector<128x128xf32>
    %cst_17 = arith.constant dense<0.000000e+00> : vector<16x128xf32>
    %13 = tpu.matmul %11, %12, %cst_17 {dimension_numbers = #tpu.dot_dimension_numbers<[1], [0], [0], [1], [0, 0, 1, 1], [], []>} : vector<16x128xf32>, vector<128x128xf32>, vector<16x128xf32> -> vector<16x128xf32>
    %c0_18 = arith.constant 0 : index
    %c0_19 = arith.constant 0 : index
    %14 = vector.load %arg6[%c0_18, %c0_19] : memref<128x128xf32, #tpu.memory_space<vmem>>, vector<128x128xf32>
    %cst_20 = arith.constant dense<0.000000e+00> : vector<1x128xf32>
    %15 = tpu.matmul %7, %14, %cst_20 {dimension_numbers = #tpu.dot_dimension_numbers<[1], [0], [0], [1], [0, 0, 1, 1], [], []>} : vector<1x128xf32>, vector<128x128xf32>, vector<1x128xf32> -> vector<1x128xf32>
    %c0_21 = arith.constant 0 : index
    %c0_22 = arith.constant 0 : index
    %16 = vector.load %arg8[%c0_21, %c0_22] : memref<128x128xf32, #tpu.memory_space<vmem>>, vector<128x128xf32>
    %cst_23 = arith.constant dense<0.000000e+00> : vector<1x128xf32>
    %17 = tpu.matmul %5, %16, %cst_23 {dimension_numbers = #tpu.dot_dimension_numbers<[1], [0], [0], [1], [0, 0, 1, 1], [], []>} : vector<1x128xf32>, vector<128x128xf32>, vector<1x128xf32> -> vector<1x128xf32>
    %18 = vector.shape_cast %10 : vector<16x128xf32> to vector<1x16x128xf32>
    %19 = vector.shape_cast %15 : vector<1x128xf32> to vector<1x1x128xf32>
    %20 = vector.broadcast %19 : vector<1x1x128xf32> to vector<1x16x128xf32>
    %21 = arith.addf %18, %20 : vector<1x16x128xf32>
    %22 = vector.shape_cast %13 : vector<16x128xf32> to vector<1x16x128xf32>
    %23 = vector.shape_cast %17 : vector<1x128xf32> to vector<1x1x128xf32>
    %24 = vector.broadcast %23 : vector<1x1x128xf32> to vector<1x16x128xf32>
    %25 = arith.addf %22, %24 : vector<1x16x128xf32>
    %c0_24 = arith.constant 0 : index
    %c0_25 = arith.constant 0 : index
    %c0_26 = arith.constant 0 : index
    %26 = vector.load %arg9[%c0_24, %c0_25, %c0_26] : memref<1x16x128xf32, #tpu.memory_space<vmem>>, vector<1x16x128xf32>
    tpu.vector_store %arg9[%c0_24, %c0_25, %c0_26], %21 {strides = array<i32>} : memref<1x16x128xf32, #tpu.memory_space<vmem>>, vector<1x16x128xf32>,
    %c0_27 = arith.constant 0 : index
    %c0_28 = arith.constant 0 : index
    %c0_29 = arith.constant 0 : index
    %27 = vector.load %arg10[%c0_27, %c0_28, %c0_29] : memref<1x16x128xf32, #tpu.memory_space<vmem>>, vector<1x16x128xf32>
    tpu.vector_store %arg10[%c0_27, %c0_28, %c0_29], %25 {strides = array<i32>} : memref<1x16x128xf32, #tpu.memory_space<vmem>>, vector<1x16x128xf32>,
    return
  }
  func.func @transform_0(%arg0: i32) -> (i32, i32, i32) {
    %c0_i32 = arith.constant 0 : i32
    %c0_i32_0 = arith.constant 0 : i32
    %c0_i32_1 = arith.constant 0 : i32
    return %arg0, %c0_i32, %c0_i32_0 : i32, i32, i32
  }
  func.func @transform_1(%arg0: i32) -> (i32, i32, i32) {
    %c0_i32 = arith.constant 0 : i32
    %c0_i32_0 = arith.constant 0 : i32
    %c0_i32_1 = arith.constant 0 : i32
    return %arg0, %c0_i32, %c0_i32_0 : i32, i32, i32
  }
  func.func @transform_2(%arg0: i32) -> (i32, i32, i32) {
    %c0_i32 = arith.constant 0 : i32
    %c0_i32_0 = arith.constant 0 : i32
    %c0_i32_1 = arith.constant 0 : i32
    return %arg0, %c0_i32, %c0_i32_0 : i32, i32, i32
  }
  func.func @transform_3(%arg0: i32) -> (i32, i32, i32) {
    %c0_i32 = arith.constant 0 : i32
    %c0_i32_0 = arith.constant 0 : i32
    %c0_i32_1 = arith.constant 0 : i32
    return %arg0, %c0_i32, %c0_i32_0 : i32, i32, i32
  }
  func.func @transform_4(%arg0: i32) -> (i32, i32) {
    %c0_i32 = arith.constant 0 : i32
    %c0_i32_0 = arith.constant 0 : i32
    %c0_i32_1 = arith.constant 0 : i32
    return %c0_i32, %c0_i32_0 : i32, i32
  }
  func.func @transform_5(%arg0: i32) -> (i32, i32) {
    %c0_i32 = arith.constant 0 : i32
    %c0_i32_0 = arith.constant 0 : i32
    %c0_i32_1 = arith.constant 0 : i32
    return %c0_i32, %c0_i32_0 : i32, i32
  }
  func.func @transform_6(%arg0: i32) -> (i32, i32) {
    %c0_i32 = arith.constant 0 : i32
    %c0_i32_0 = arith.constant 0 : i32
    %c0_i32_1 = arith.constant 0 : i32
    return %c0_i32, %c0_i32_0 : i32, i32
  }
  func.func @transform_7(%arg0: i32) -> (i32, i32) {
    %c0_i32 = arith.constant 0 : i32
    %c0_i32_0 = arith.constant 0 : i32
    %c0_i32_1 = arith.constant 0 : i32
    return %c0_i32, %c0_i32_0 : i32, i32
  }
  func.func @transform_8(%arg0: i32) -> (i32, i32, i32) {
    %c0_i32 = arith.constant 0 : i32
    %c0_i32_0 = arith.constant 0 : i32
    %c0_i32_1 = arith.constant 0 : i32
    return %arg0, %c0_i32, %c0_i32_0 : i32, i32, i32
  }
  func.func @transform_9(%arg0: i32) -> (i32, i32, i32) {
    %c0_i32 = arith.constant 0 : i32
    %c0_i32_0 = arith.constant 0 : i32
    %c0_i32_1 = arith.constant 0 : i32
    return %arg0, %c0_i32, %c0_i32_0 : i32, i32, i32
  }
}

</mosaic_0001>

<llo_original>
// kernel: tpu_custom_call.1
$region0: #{tpu_custom_call.1}
  #allocation0 [shape = 'u32[]', space=smem, size = 0x4, offset = 0x4, fixed_abs, tag = 'smem constant byte address 0x4 - core index']
  #allocation1 [shape = 'u32[72,128]{1,0:T(1,128)}', space=vmem, size = 0x9000, scoped, tag = 'internal scratch']
  %s0 = inlined_call_operand.hbm [shape: f32[2,16,128], index: 0, kind: input, shape index: {}]
  %s1 = inlined_call_operand.hbm [shape: f32[2,16,128], index: 1, kind: input, shape index: {}]
  %s2 = inlined_call_operand.hbm [shape: f32[2,1,16], index: 2, kind: input, shape index: {}]
  %s3 = inlined_call_operand.vmem [shape: f32[2,1,16], index: 3, kind: input, shape index: {}]
  %s4 = inlined_call_operand.hbm [shape: f32[128,128], index: 4, kind: input, shape index: {}]
  %s5 = inlined_call_operand.hbm [shape: f32[128,128], index: 5, kind: input, shape index: {}]
  %s6 = inlined_call_operand.hbm [shape: f32[128,128], index: 6, kind: input, shape index: {}]
  %s7 = inlined_call_operand.hbm [shape: f32[128,128], index: 7, kind: input, shape index: {}]
  %s8 = inlined_call_operand.hbm [shape: f32[2,16,128], index: 8, kind: output, shape index: {0}]
  %s9 = inlined_call_operand.hbm [shape: f32[2,16,128], index: 9, kind: output, shape index: {1}]
  %10 = xla_tuple %s8, %s9
  %s11 = sld [smem:[#allocation0]]
  $region101: #{tpu_custom_call.1} parent=0
    _
  %s13 = ssub.s32 1, %s11
  %s14 = scalar_select 0, %s13, %s11
  $region1: #{tpu_custom_call.1} parent=0
    #allocation2 [shape = 'u8[16384]{0}', space=vmem, size = 0x4000, scoped, tag = 'input window, operand 0']
    #allocation3 [shape = 's32[2]{0}', space=sflag, size = 0x8, scoped, tag = 'scoped memory for tpu_custom_call.1']
    #allocation4 [shape = 's32[2]{0}', space=sflag, size = 0x8, scoped, tag = 'scoped memory for tpu_custom_call.1']
    #allocation5 [shape = 'u8[16384]{0}', space=vmem, size = 0x4000, scoped, tag = 'input window, operand 1']
    #allocation6 [shape = 's32[2]{0}', space=sflag, size = 0x8, scoped, tag = 'scoped memory for tpu_custom_call.1']
    #allocation7 [shape = 'u8[1024]{0}', space=vmem, size = 0x400, scoped, tag = 'input window, operand 2']
    #allocation8 [shape = 'u8[65536]{0}', space=vmem, size = 0x10000, scoped, tag = 'input window, operand 4, single buffered']
    #allocation9 [shape = 's32[1]{0}', space=sflag, size = 0x4, scoped, tag = 'scoped memory for tpu_custom_call.1']
    #allocation10 [shape = 'u8[65536]{0}', space=vmem, size = 0x10000, scoped, tag = 'input window, operand 5, single buffered']
    #allocation11 [shape = 'u8[65536]{0}', space=vmem, size = 0x10000, scoped, tag = 'input window, operand 6, single buffered']
    #allocation12 [shape = 's32[1]{0}', space=sflag, size = 0x4, scoped, tag = 'scoped memory for tpu_custom_call.1']
    #allocation13 [shape = 'u8[65536]{0}', space=vmem, size = 0x10000, scoped, tag = 'input window, operand 7, single buffered']
    #allocation14 [shape = 'u8[16384]{0}', space=vmem, size = 0x4000, scoped, tag = 'output window, operand 0']
    #allocation15 [shape = 'u8[16384]{0}', space=vmem, size = 0x4000, scoped, tag = 'output window, operand 1']
    #allocation16 [shape = 's32[2]{0}', space=sflag, size = 0x8, scoped, tag = 'scoped memory for tpu_custom_call.1']
    %15 = vsyncpa [#allocation3], 0
    %s16 = scalar_lea.sflag [#allocation3], 1
    %17 = vsyncpa %s16, 0
    %18 = vsyncpa [#allocation6], 0
    %s19 = scalar_lea.sflag [#allocation6], 1
    %20 = vsyncpa %s19, 0
    %21 = vsyncpa [#allocation9], 0
    %22 = vsyncpa [#allocation12], 0
    %23 = vsyncpa [#allocation4], 0
    %s24 = scalar_lea.sflag [#allocation4], 1
    %25 = vsyncpa %s24, 0
    %26 = vsyncpa [#allocation16], 0
    %s27 = scalar_lea.sflag [#allocation16], 1
    %28 = vsyncpa %s27, 0
    loop: start=0, step=1, limit=4
    $region2: #{tpu_custom_call.1} parent=1 // loop_pre_header
      _
    $region3: #{tpu_custom_call.1} parent=1 // loop_header
      %s30 = sphi 0, %s34
      %p31 = scmp.ge.s32.totalorder %s30, 4
      %s40 = sphi 0, %s42
      %s43 = sphi 0, %s40
      %s44 = sphi 0, %s43
      %s60 = sphi 0, %s44
      %s66 = sphi 0, %s68
      %s69 = sphi 0, %s66
      %s70 = sphi 0, %s69
      %s86 = sphi 0, %s70
      %s92 = sphi 0, %s94
      %s95 = sphi 0, %s92
      %s96 = sphi 0, %s95
      %s112 = sphi 0, %s96
      %s118 = sphi 0, %s120
      %s121 = sphi 0, %s118
      %s122 = sphi 0, %s121
      %s138 = sphi 0, %s122
      %s142 = sphi 0, %s142
      %s144 = sphi 0, %s142
      %s145 = sphi 0, %s144
      %s159 = sphi 0, %s145
      %s163 = sphi 0, %s163
      %s165 = sphi 0, %s163
      %s166 = sphi 0, %s165
      %s180 = sphi 0, %s166
      %s184 = sphi 0, %s184
      %s186 = sphi 0, %s184
      %s187 = sphi 0, %s186
      %s201 = sphi 0, %s187
      %s205 = sphi 0, %s205
      %s207 = sphi 0, %s205
      %s208 = sphi 0, %s207
      %s222 = sphi 0, %s208
      %s228 = sphi 0, %s230
      %s231 = sphi 0, %s228
      %s232 = sphi 0, %s231
      %s248 = sphi 0, %s232
      %s254 = sphi 0, %s256
      %s257 = sphi 0, %s254
      %s258 = sphi 0, %s257
      %s274 = sphi 0, %s258
    $region4: #{tpu_custom_call.1} parent=1 // loop_header_branch
      %33 = sbr.rel (%p31) target = $region8
    $region5: #{tpu_custom_call.1} parent=1 // loop_body
      %s35 = ssub.s32 %s30, 1
      %s36 = ssub.s32 %s30, 2
      %s37 = sadd.s32 %s30, 1
      %s38 = ssub.s32 %s30, %s37
      %p39 = scmp.eq.s32.totalorder %s38, 0
      %s41 = sadd.s32 %s40, 1
      %s42 = scalar_select %p39, %s40, %s41
      %p45 = pneg %p39
      %p46 = scmp.eq.s32.totalorder %s30, 1
      %p47 = por %p45, %p46
      %p48 = scmp.ne.s32.totalorder %s40, %s43
      %p49 = scmp.eq.s32.totalorder %s30, 0
      %p50 = por %p48, %p49
      %p51 = scmp.ne.s32.totalorder %s40, %s43
      %p52 = scmp.eq.s32.totalorder %s35, 1
      %p53 = por %p51, %p52
      %p54 = scmp.ne.s32.totalorder %s43, %s44
      %p55 = scmp.eq.s32.totalorder %s35, 0
      %p56 = por %p54, %p55
      %p57 = scmp.ne.s32.totalorder %s43, %s44
      %p58 = scmp.eq.s32.totalorder %s36, 1
      %p59 = por %p57, %p58
      %p61 = scmp.ne.s32.totalorder %s44, %s60
      %p62 = scmp.eq.s32.totalorder %s36, 0
      %p63 = por %p61, %p62
      %s64 = ssub.s32 %s30, %s37
      %p65 = scmp.eq.s32.totalorder %s64, 0
      %s67 = sadd.s32 %s66, 1
      %s68 = scalar_select %p65, %s66, %s67
      %p71 = pneg %p65
      %p72 = scmp.eq.s32.totalorder %s30, 1
      %p73 = por %p71, %p72
      %p74 = scmp.ne.s32.totalorder %s66, %s69
      %p75 = scmp.eq.s32.totalorder %s30, 0
      %p76 = por %p74, %p75
      %p77 = scmp.ne.s32.totalorder %s66, %s69
      %p78 = scmp.eq.s32.totalorder %s35, 1
      %p79 = por %p77, %p78
      %p80 = scmp.ne.s32.totalorder %s69, %s70
      %p81 = scmp.eq.s32.totalorder %s35, 0
      %p82 = por %p80, %p81
      %p83 = scmp.ne.s32.totalorder %s69, %s70
      %p84 = scmp.eq.s32.totalorder %s36, 1
      %p85 = por %p83, %p84
      %p87 = scmp.ne.s32.totalorder %s70, %s86
      %p88 = scmp.eq.s32.totalorder %s36, 0
      %p89 = por %p87, %p88
      %s90 = ssub.s32 %s30, %s37
      %p91 = scmp.eq.s32.totalorder %s90, 0
      %s93 = sadd.s32 %s92, 1
      %s94 = scalar_select %p91, %s92, %s93
      %p97 = pneg %p91
      %p98 = scmp.eq.s32.totalorder %s30, 1
      %p99 = por %p97, %p98
      %p100 = scmp.ne.s32.totalorder %s92, %s95
      %p101 = scmp.eq.s32.totalorder %s30, 0
      %p102 = por %p100, %p101
      %p103 = scmp.ne.s32.totalorder %s92, %s95
      %p104 = scmp.eq.s32.totalorder %s35, 1
      %p105 = por %p103, %p104
      %p106 = scmp.ne.s32.totalorder %s95, %s96
      %p107 = scmp.eq.s32.totalorder %s35, 0
      %p108 = por %p106, %p107
      %p109 = scmp.ne.s32.totalorder %s95, %s96
      %p110 = scmp.eq.s32.totalorder %s36, 1
      %p111 = por %p109, %p110
      %p113 = scmp.ne.s32.totalorder %s96, %s112
      %p114 = scmp.eq.s32.totalorder %s36, 0
      %p115 = por %p113, %p114
      %s116 = ssub.s32 %s30, %s37
      %p117 = scmp.eq.s32.totalorder %s116, 0
      %s119 = sadd.s32 %s118, 1
      %s120 = scalar_select %p117, %s118, %s119
      %p123 = pneg %p117
      %p124 = scmp.eq.s32.totalorder %s30, 1
      %p125 = por %p123, %p124
      %p126 = scmp.ne.s32.totalorder %s118, %s121
      %p127 = scmp.eq.s32.totalorder %s30, 0
      %p128 = por %p126, %p127
      %p129 = scmp.ne.s32.totalorder %s118, %s121
      %p130 = scmp.eq.s32.totalorder %s35, 1
      %p131 = por %p129, %p130
      %p132 = scmp.ne.s32.totalorder %s121, %s122
      %p133 = scmp.eq.s32.totalorder %s35, 0
      %p134 = por %p132, %p133
      %p135 = scmp.ne.s32.totalorder %s121, %s122
      %p136 = scmp.eq.s32.totalorder %s36, 1
      %p137 = por %p135, %p136
      %p139 = scmp.ne.s32.totalorder %s122, %s138
      %p140 = scmp.eq.s32.totalorder %s36, 0
      %p141 = por %p139, %p140
      %s143 = sadd.s32 %s142, 1
      %p146 = scmp.eq.s32.totalorder %s30, 1
      %p147 = scmp.ne.s32.totalorder %s142, %s144
      %p148 = scmp.eq.s32.totalorder %s30, 0
      %p149 = por %p147, %p148
      %p150 = scmp.ne.s32.totalorder %s142, %s144
      %p151 = scmp.eq.s32.totalorder %s35, 1
      %p152 = por %p150, %p151
      %p153 = scmp.ne.s32.totalorder %s144, %s145
      %p154 = scmp.eq.s32.totalorder %s35, 0
      %p155 = por %p153, %p154
      %p156 = scmp.ne.s32.totalorder %s144, %s145
      %p157 = scmp.eq.s32.totalorder %s36, 1
      %p158 = por %p156, %p157
      %p160 = scmp.ne.s32.totalorder %s145, %s159
      %p161 = scmp.eq.s32.totalorder %s36, 0
      %p162 = por %p160, %p161
      %s164 = sadd.s32 %s163, 1
      %p167 = scmp.eq.s32.totalorder %s30, 1
      %p168 = scmp.ne.s32.totalorder %s163, %s165
      %p169 = scmp.eq.s32.totalorder %s30, 0
      %p170 = por %p168, %p169
      %p171 = scmp.ne.s32.totalorder %s163, %s165
      %p172 = scmp.eq.s32.totalorder %s35, 1
      %p173 = por %p171, %p172
      %p174 = scmp.ne.s32.totalorder %s165, %s166
      %p175 = scmp.eq.s32.totalorder %s35, 0
      %p176 = por %p174, %p175
      %p177 = scmp.ne.s32.totalorder %s165, %s166
      %p178 = scmp.eq.s32.totalorder %s36, 1
      %p179 = por %p177, %p178
      %p181 = scmp.ne.s32.totalorder %s166, %s180
      %p182 = scmp.eq.s32.totalorder %s36, 0
      %p183 = por %p181, %p182
      %s185 = sadd.s32 %s184, 1
      %p188 = scmp.eq.s32.totalorder %s30, 1
      %p189 = scmp.ne.s32.totalorder %s184, %s186
      %p190 = scmp.eq.s32.totalorder %s30, 0
      %p191 = por %p189, %p190
      %p192 = scmp.ne.s32.totalorder %s184, %s186
      %p193 = scmp.eq.s32.totalorder %s35, 1
      %p194 = por %p192, %p193
      %p195 = scmp.ne.s32.totalorder %s186, %s187
      %p196 = scmp.eq.s32.totalorder %s35, 0
      %p197 = por %p195, %p196
      %p198 = scmp.ne.s32.totalorder %s186, %s187
      %p199 = scmp.eq.s32.totalorder %s36, 1
      %p200 = por %p198, %p199
      %p202 = scmp.ne.s32.totalorder %s187, %s201
      %p203 = scmp.eq.s32.totalorder %s36, 0
      %p204 = por %p202, %p203
      %s206 = sadd.s32 %s205, 1
      %p209 = scmp.eq.s32.totalorder %s30, 1
      %p210 = scmp.ne.s32.totalorder %s205, %s207
      %p211 = scmp.eq.s32.totalorder %s30, 0
      %p212 = por %p210, %p211
      %p213 = scmp.ne.s32.totalorder %s205, %s207
      %p214 = scmp.eq.s32.totalorder %s35, 1
      %p215 = por %p213, %p214
      %p216 = scmp.ne.s32.totalorder %s207, %s208
      %p217 = scmp.eq.s32.totalorder %s35, 0
      %p218 = por %p216, %p217
      %p219 = scmp.ne.s32.totalorder %s207, %s208
      %p220 = scmp.eq.s32.totalorder %s36, 1
      %p221 = por %p219, %p220
      %p223 = scmp.ne.s32.totalorder %s208, %s222
      %p224 = scmp.eq.s32.totalorder %s36, 0
      %p225 = por %p223, %p224
      %s226 = ssub.s32 %s30, %s37
      %p227 = scmp.eq.s32.totalorder %s226, 0
      %s229 = sadd.s32 %s228, 1
      %s230 = scalar_select %p227, %s228, %s229
      %p233 = pneg %p227
      %p234 = scmp.eq.s32.totalorder %s30, 1
      %p235 = por %p233, %p234
      %p236 = scmp.ne.s32.totalorder %s228, %s231
      %p237 = scmp.eq.s32.totalorder %s30, 0
      %p238 = por %p236, %p237
      %p239 = scmp.ne.s32.totalorder %s228, %s231
      %p240 = scmp.eq.s32.totalorder %s35, 1
      %p241 = por %p239, %p240
      %p242 = scmp.ne.s32.totalorder %s231, %s232
      %p243 = scmp.eq.s32.totalorder %s35, 0
      %p244 = por %p242, %p243
      %p245 = scmp.ne.s32.totalorder %s231, %s232
      %p246 = scmp.eq.s32.totalorder %s36, 1
      %p247 = por %p245, %p246
      %p249 = scmp.ne.s32.totalorder %s232, %s248
      %p250 = scmp.eq.s32.totalorder %s36, 0
      %p251 = por %p249, %p250
      %s252 = ssub.s32 %s30, %s37
      %p253 = scmp.eq.s32.totalorder %s252, 0
      %s255 = sadd.s32 %s254, 1
      %s256 = scalar_select %p253, %s254, %s255
      %p259 = pneg %p253
      %p260 = scmp.eq.s32.totalorder %s30, 1
      %p261 = por %p259, %p260
      %p262 = scmp.ne.s32.totalorder %s254, %s257
      %p263 = scmp.eq.s32.totalorder %s30, 0
      %p264 = por %p262, %p263
      %p265 = scmp.ne.s32.totalorder %s254, %s257
      %p266 = scmp.eq.s32.totalorder %s35, 1
      %p267 = por %p265, %p266
      %p268 = scmp.ne.s32.totalorder %s257, %s258
      %p269 = scmp.eq.s32.totalorder %s35, 0
      %p270 = por %p268, %p269
      %p271 = scmp.ne.s32.totalorder %s257, %s258
      %p272 = scmp.eq.s32.totalorder %s36, 1
      %p273 = por %p271, %p272
      %p275 = scmp.ne.s32.totalorder %s258, %s274
      %p276 = scmp.eq.s32.totalorder %s36, 0
      %p277 = por %p275, %p276
      %p278 = scmp.le.s32.totalorder 1, %s30
      %p279 = scmp.lt.s32.totalorder %s30, 3
      %p280 = pnand %p278, %p279
      %p281 = pneg %p280
      // Predicated region
      $region9: #{tpu_custom_call.1} parent=5 // pred_check
        _
      $region10: #{tpu_custom_call.1} parent=5 // pred_check_branch
        %283 = sbr.rel (%p280) target = $region12
      $region11: #{tpu_custom_call.1} parent=5 // pred_region
        %s284 = ssub.s32 %s30, 1
        // Predicated region
        $region13: #{tpu_custom_call.1} parent=11 // pred_check
          %p285 = pneg %p155
        $region14: #{tpu_custom_call.1} parent=11 // pred_check_branch
          %287 = sbr.rel (%p285) target = $region16
        $region15: #{tpu_custom_call.1} parent=11 // pred_region
          %289 = vsyncadd [#allocation9], 0
          %s290 = sshll.u32 %s4, 4
          %s291 = int_to_ptr.hbm [resolvable:$true] %s290
          %s292 = sshll.u32 [#allocation8], 4
          %s293 = int_to_ptr.vmem [resolvable:$true] %s292
          %298 = dma.hbm_to_vmem [thread:$0]  %s291, 2048, %s293, [#allocation9], 128, 128, 8
        $region16: #{tpu_custom_call.1} parent=11 // pred_fallthru
          _
        // Predicated region
        $region17: #{tpu_custom_call.1} parent=11 // pred_check
          %p299 = pneg %p176
        $region18: #{tpu_custom_call.1} parent=11 // pred_check_branch
          %301 = sbr.rel (%p299) target = $region20
        $region19: #{tpu_custom_call.1} parent=11 // pred_region
          %303 = vsyncadd [#allocation9], 0
          %s304 = sshll.u32 %s5, 4
          %s305 = int_to_ptr.hbm [resolvable:$true] %s304
          %s306 = sshll.u32 [#allocation10], 4
          %s307 = int_to_ptr.vmem [resolvable:$true] %s306
          %312 = dma.hbm_to_vmem [thread:$0]  %s305, 2048, %s307, [#allocation9], 128, 128, 8
        $region20: #{tpu_custom_call.1} parent=11 // pred_fallthru
          _
        // Predicated region
        $region21: #{tpu_custom_call.1} parent=11 // pred_check
          %p313 = pneg %p197
        $region22: #{tpu_custom_call.1} parent=11 // pred_check_branch
          %315 = sbr.rel (%p313) target = $region24
        $region23: #{tpu_custom_call.1} parent=11 // pred_region
          %317 = vsyncadd [#allocation12], 0
          %s318 = sshll.u32 %s6, 4
          %s319 = int_to_ptr.hbm [resolvable:$true] %s318
          %s320 = sshll.u32 [#allocation11], 4
          %s321 = int_to_ptr.vmem [resolvable:$true] %s320
          %326 = dma.hbm_to_vmem [thread:$0]  %s319, 2048, %s321, [#allocation12], 128, 128, 8
        $region24: #{tpu_custom_call.1} parent=11 // pred_fallthru
          _
        // Predicated region
        $region25: #{tpu_custom_call.1} parent=11 // pred_check
          %p327 = pneg %p218
        $region26: #{tpu_custom_call.1} parent=11 // pred_check_branch
          %329 = sbr.rel (%p327) target = $region28
        $region27: #{tpu_custom_call.1} parent=11 // pred_region
          %331 = vsyncadd [#allocation12], 0
          %s332 = sshll.u32 %s7, 4
          %s333 = int_to_ptr.hbm [resolvable:$true] %s332
          %s334 = sshll.u32 [#allocation13], 4
          %s335 = int_to_ptr.vmem [resolvable:$true] %s334
          %340 = dma.hbm_to_vmem [thread:$0]  %s333, 2048, %s335, [#allocation12], 128, 128, 8
        $region28: #{tpu_custom_call.1} parent=11 // pred_fallthru
          _
      $region12: #{tpu_custom_call.1} parent=5 // pred_fallthru
        _
      %p341 = scmp.lt.s32.totalorder %s30, 2
      // Predicated region
      $region29: #{tpu_custom_call.1} parent=5 // pred_check
        %p342 = pneg %p341
      $region30: #{tpu_custom_call.1} parent=5 // pred_check_branch
        %344 = sbr.rel (%p342) target = $region32
      $region31: #{tpu_custom_call.1} parent=5 // pred_region
        // Predicated region
        $region33: #{tpu_custom_call.1} parent=31 // pred_check
          %p345 = pneg %p50
        $region34: #{tpu_custom_call.1} parent=31 // pred_check_branch
          %347 = sbr.rel (%p345) target = $region36
        $region35: #{tpu_custom_call.1} parent=31 // pred_region
          %s348 = sand.u32 %s40, 1
          %s349 = scalar_lea.sflag [#allocation3], %s348
          %s350 = sand.u32 %s40, 1
          %s351 = smul.addr %s350, 16
          %s352 = scalar_lea.vmem [#allocation2], %s351
          %354 = vsyncadd %s349, 0
          %s355 = smul.addr %s30, 2
          %s356 = smul.addr %s355, 8
          %s357 = scalar_lea.hbm %s0, %s356
          %s358 = sshll.u32 %s357, 4
          %s359 = int_to_ptr.hbm [resolvable:$true] %s358
          %s360 = sshll.u32 %s352, 4
          %s361 = int_to_ptr.vmem [resolvable:$true] %s360
          %366 = dma.hbm_to_vmem [thread:$0]  %s359, 256, %s361, %s349, 128, 128, 8
        $region36: #{tpu_custom_call.1} parent=31 // pred_fallthru
          _
        // Predicated region
        $region37: #{tpu_custom_call.1} parent=31 // pred_check
          %p367 = pneg %p76
        $region38: #{tpu_custom_call.1} parent=31 // pred_check_branch
          %369 = sbr.rel (%p367) target = $region40
        $region39: #{tpu_custom_call.1} parent=31 // pred_region
          %s370 = sand.u32 %s30, 1
          %s371 = scalar_lea.sflag [#allocation6], %s370
          %s372 = sand.u32 %s66, 1
          %s373 = smul.addr %s372, 16
          %s374 = scalar_lea.vmem [#allocation5], %s373
          %376 = vsyncadd %s371, 0
          %s377 = smul.addr %s30, 2
          %s378 = smul.addr %s377, 8
          %s379 = scalar_lea.hbm %s1, %s378
          %s380 = sshll.u32 %s379, 4
          %s381 = int_to_ptr.hbm [resolvable:$true] %s380
          %s382 = sshll.u32 %s374, 4
          %s383 = int_to_ptr.vmem [resolvable:$true] %s382
          %388 = dma.hbm_to_vmem [thread:$0]  %s381, 256, %s383, %s371, 128, 128, 8
        $region40: #{tpu_custom_call.1} parent=31 // pred_fallthru
          _
        // Predicated region
        $region41: #{tpu_custom_call.1} parent=31 // pred_check
          %p389 = pneg %p102
        $region42: #{tpu_custom_call.1} parent=31 // pred_check_branch
          %391 = sbr.rel (%p389) target = $region44
        $region43: #{tpu_custom_call.1} parent=31 // pred_region
          %s392 = sand.u32 %s30, 1
          %s393 = scalar_lea.sflag [#allocation6], %s392
          %s394 = sand.u32 %s92, 1
          %s395 = scalar_lea.vmem [#allocation7], %s394
          %397 = vsyncadd %s393, 0
          %s398 = scalar_lea.hbm %s2, %s30
          %s400 = sshll.u32 %s398, 4
          %s401 = int_to_ptr.hbm [resolvable:$true] %s400
          %s402 = sshll.u32 %s395, 4
          %s403 = int_to_ptr.vmem [resolvable:$true] %s402
          %405 = dma.hbm_to_vmem [thread:$0]  %s401, 16, %s403, %s393
        $region44: #{tpu_custom_call.1} parent=31 // pred_fallthru
          _
        // Predicated region
        $region45: #{tpu_custom_call.1} parent=31 // pred_check
          %p406 = pneg %p128
        $region46: #{tpu_custom_call.1} parent=31 // pred_check_branch
          %408 = sbr.rel (%p406) target = $region48
        $region47: #{tpu_custom_call.1} parent=31 // pred_region
          %p409 = scmp.lt.s32.totalorder %s30, 1
          %s410 = scalar_select %p409, %s30, 1
          %s411 = scalar_lea.vmem %s3, %s410
        $region48: #{tpu_custom_call.1} parent=31 // pred_fallthru
          _
      $region32: #{tpu_custom_call.1} parent=5 // pred_fallthru
        _
      %p412 = scmp.le.s32.totalorder 1, %s30
      %p413 = scmp.lt.s32.totalorder %s30, 3
      %p414 = pnand %p412, %p413
      %p415 = pneg %p414
      // Predicated region
      $region49: #{tpu_custom_call.1} parent=5 // pred_check
        _
      $region50: #{tpu_custom_call.1} parent=5 // pred_check_branch
        %417 = sbr.rel (%p414) target = $region52
      $region51: #{tpu_custom_call.1} parent=5 // pred_region
        %s418 = ssub.s32 %s30, 1
        %s419 = sand.u32 %s43, 1
        %s420 = scalar_lea.sflag [#allocation3], %s419
        %s421 = sand.u32 %s43, 1
        %s422 = smul.addr %s421, 16
        %s423 = scalar_lea.vmem [#allocation2], %s422
        // Predicated region
        $region53: #{tpu_custom_call.1} parent=51 // pred_check
          %p424 = pneg %p56
        $region54: #{tpu_custom_call.1} parent=51 // pred_check_branch
          %426 = sbr.rel (%p424) target = $region56
        $region55: #{tpu_custom_call.1} parent=51 // pred_region
          %428 = dma.done %s420, 256
        $region56: #{tpu_custom_call.1} parent=51 // pred_fallthru
          _
        %s429 = sand.u32 %s35, 1
        %s430 = scalar_lea.sflag [#allocation6], %s429
        %s431 = sand.u32 %s69, 1
        %s432 = smul.addr %s431, 16
        %s433 = scalar_lea.vmem [#allocation5], %s432
        // Predicated region
        $region57: #{tpu_custom_call.1} parent=51 // pred_check
          %p434 = pneg %p82
        $region58: #{tpu_custom_call.1} parent=51 // pred_check_branch
          %436 = sbr.rel (%p434) target = $region60
        $region59: #{tpu_custom_call.1} parent=51 // pred_region
          %438 = dma.done %s430, 256
        $region60: #{tpu_custom_call.1} parent=51 // pred_fallthru
          _
        %s439 = sand.u32 %s35, 1
        %s440 = scalar_lea.sflag [#allocation6], %s439
        %s441 = sand.u32 %s95, 1
        %s442 = scalar_lea.vmem [#allocation7], %s441
        // Predicated region
        $region61: #{tpu_custom_call.1} parent=51 // pred_check
          %p443 = pneg %p108
        $region62: #{tpu_custom_call.1} parent=51 // pred_check_branch
          %445 = sbr.rel (%p443) target = $region64
        $region63: #{tpu_custom_call.1} parent=51 // pred_region
          %447 = dma.done %s440, 16
        $region64: #{tpu_custom_call.1} parent=51 // pred_fallthru
          _
        // Predicated region
        $region65: #{tpu_custom_call.1} parent=51 // pred_check
          %p448 = pneg %p155
        $region66: #{tpu_custom_call.1} parent=51 // pred_check_branch
          %450 = sbr.rel (%p448) target = $region68
        $region67: #{tpu_custom_call.1} parent=51 // pred_region
          %452 = dma.done [#allocation9], 2048
        $region68: #{tpu_custom_call.1} parent=51 // pred_fallthru
          _
        // Predicated region
        $region69: #{tpu_custom_call.1} parent=51 // pred_check
          %p453 = pneg %p176
        $region70: #{tpu_custom_call.1} parent=51 // pred_check_branch
          %455 = sbr.rel (%p453) target = $region72
        $region71: #{tpu_custom_call.1} parent=51 // pred_region
          %457 = dma.done [#allocation9], 2048
        $region72: #{tpu_custom_call.1} parent=51 // pred_fallthru
          _
        // Predicated region
        $region73: #{tpu_custom_call.1} parent=51 // pred_check
          %p458 = pneg %p197
        $region74: #{tpu_custom_call.1} parent=51 // pred_check_branch
          %460 = sbr.rel (%p458) target = $region76
        $region75: #{tpu_custom_call.1} parent=51 // pred_region
          %462 = dma.done [#allocation12], 2048
        $region76: #{tpu_custom_call.1} parent=51 // pred_fallthru
          _
        // Predicated region
        $region77: #{tpu_custom_call.1} parent=51 // pred_check
          %p463 = pneg %p218
        $region78: #{tpu_custom_call.1} parent=51 // pred_check_branch
          %465 = sbr.rel (%p463) target = $region80
        $region79: #{tpu_custom_call.1} parent=51 // pred_region
          %467 = dma.done [#allocation12], 2048
        $region80: #{tpu_custom_call.1} parent=51 // pred_fallthru
          _
        %s468 = sand.u32 %s43, 1
        %s469 = scalar_lea.sflag [#allocation3], %s468
        %s470 = sand.u32 %s43, 1
        %s471 = smul.addr %s470, 16
        %s472 = scalar_lea.vmem [#allocation2], %s471
        %p473 = pneg %p56
        %p474 = pneg %p53
        %s475 = sand.u32 %s35, 1
        %s476 = scalar_lea.sflag [#allocation6], %s475
        %s477 = sand.u32 %s69, 1
        %s478 = smul.addr %s477, 16
        %s479 = scalar_lea.vmem [#allocation5], %s478
        %p480 = pneg %p82
        %p481 = pneg %p79
        %s482 = sand.u32 %s35, 1
        %s483 = scalar_lea.sflag [#allocation6], %s482
        %s484 = sand.u32 %s95, 1
        %s485 = scalar_lea.vmem [#allocation7], %s484
        %p486 = pneg %p108
        %p487 = pneg %p105
        %p488 = scmp.lt.s32.totalorder %s35, 1
        %s489 = scalar_select %p488, %s35, 1
        %s490 = scalar_lea.vmem %s3, %s489
        %p491 = pneg %p134
        %p492 = pneg %p131
        %p493 = pneg %p155
        %p494 = pneg %p152
        %p495 = pneg %p176
        %p496 = pneg %p173
        %p497 = pneg %p197
        %p498 = pneg %p194
        %p499 = pneg %p218
        %p500 = pneg %p215
        %p501 = pneg %p244
        %p502 = pneg %p241
        %s503 = sand.u32 %s231, 1
        %s504 = scalar_lea.sflag [#allocation4], %s503
        %s505 = sand.u32 %s231, 1
        %s506 = smul.addr %s505, 16
        %s507 = scalar_lea.vmem [#allocation14], %s506
        %p508 = pneg %p270
        %p509 = pneg %p267
        %s510 = sand.u32 %s257, 1
        %s511 = scalar_lea.sflag [#allocation16], %s510
        %s512 = sand.u32 %s257, 1
        %s513 = smul.addr %s512, 16
        %s514 = scalar_lea.vmem [#allocation15], %s513
        %p515 = scmp.lt.s32.totalorder %s35, 1
        %s516 = scalar_select %p515, %s35, 1
        %s517 = scalar_lea.vmem %s3, %s516
        %v518 = vld [vmem:[%s423] sm:$0xff]
        %v519 = vld [vmem:[%s423 + $0x8] sm:$0xff]
        %v520 = vld [vmem:[%s433] sm:$0xff]
        %v521 = vld [vmem:[%s433 + $0x8] sm:$0xff]
        %v522 = vld [vmem:[%s442] sm:$0x1]
        %v523 = vld [vmem:[%s517] sm:$0x1]
        %vm524 = vcmask 130048
        %v526 = vsel %vm524, %v522, 0
        %528 = vmatpush.msra.mxu0 0.0
        %529 = vmatpush.msra.mxu0 0.0
        %530 = vmatpush.msra.mxu0 0.0
        %531 = vmatpush.msra.mxu0 0.0
        %532 = vmatpush.msra.mxu0 0.0
        %533 = vmatpush.msra.mxu0 0.0
        %534 = vmatpush.msra.mxu0 0.0
        %535 = vmatpush.msra.mxu0 0.0
        %536 = vmatpush.msra.mxu0 0.0
        %537 = vmatpush.msra.mxu0 0.0
        %538 = vmatpush.msra.mxu0 0.0
        %539 = vmatpush.msra.mxu0 0.0
        %540 = vmatpush.msra.mxu0 0.0
        %541 = vmatpush.msra.mxu0 0.0
        %542 = vmatpush.msra.mxu0 %v519
        %543 = vmatpush.msra.mxu0 %v518
        %544 = vmatmul.f32.gmra.mxu0 %v526
        %v545 = vpop.f32.mrf.mxu0
        %v546 = vadd.f32 0.0, %v545
        %547 = vdwg.mxu0
        %v549 = vsel %vm524, %v523, 0
        %551 = vmatpush.msra.mxu0 0.0
        %552 = vmatpush.msra.mxu0 0.0
        %553 = vmatpush.msra.mxu0 0.0
        %554 = vmatpush.msra.mxu0 0.0
        %555 = vmatpush.msra.mxu0 0.0
        %556 = vmatpush.msra.mxu0 0.0
        %557 = vmatpush.msra.mxu0 0.0
        %558 = vmatpush.msra.mxu0 0.0
        %559 = vmatpush.msra.mxu0 0.0
        %560 = vmatpush.msra.mxu0 0.0
        %561 = vmatpush.msra.mxu0 0.0
        %562 = vmatpush.msra.mxu0 0.0
        %563 = vmatpush.msra.mxu0 0.0
        %564 = vmatpush.msra.mxu0 0.0
        %565 = vmatpush.msra.mxu0 %v521
        %566 = vmatpush.msra.mxu0 %v520
        %567 = vmatmul.f32.gmra.mxu0 %v549
        %v568 = vpop.f32.mrf.mxu0
        %v569 = vadd.f32 0.0, %v568
        %570 = vdwg.mxu0
        %v571 = vld [vmem:[#allocation8] sm:$0xff]
        %v572 = vld [vmem:[#allocation8 + $0x8] sm:$0xff]
        %v573 = vld [vmem:[#allocation8 + $0x10] sm:$0xff]
        %v574 = vld [vmem:[#allocation8 + $0x18] sm:$0xff]
        %v575 = vld [vmem:[#allocation8 + $0x20] sm:$0xff]
        %v576 = vld [vmem:[#allocation8 + $0x28] sm:$0xff]
        %v577 = vld [vmem:[#allocation8 + $0x30] sm:$0xff]
        %v578 = vld [vmem:[#allocation8 + $0x38] sm:$0xff]
        %v579 = vld [vmem:[#allocation8 + $0x40] sm:$0xff]
        %v580 = vld [vmem:[#allocation8 + $0x48] sm:$0xff]
        %v581 = vld [vmem:[#allocation8 + $0x50] sm:$0xff]
        %v582 = vld [vmem:[#allocation8 + $0x58] sm:$0xff]
        %v583 = vld [vmem:[#allocation8 + $0x60] sm:$0xff]
        %v584 = vld [vmem:[#allocation8 + $0x68] sm:$0xff]
        %v585 = vld [vmem:[#allocation8 + $0x70] sm:$0xff]
        %v586 = vld [vmem:[#allocation8 + $0x78] sm:$0xff]
        %587 = vmatpush.msra.mxu0 %v586
        %588 = vmatpush.msra.mxu0 %v585
        %589 = vmatpush.msra.mxu0 %v584
        %590 = vmatpush.msra.mxu0 %v583
        %591 = vmatpush.msra.mxu0 %v582
        %592 = vmatpush.msra.mxu0 %v581
        %593 = vmatpush.msra.mxu0 %v580
        %594 = vmatpush.msra.mxu0 %v579
        %595 = vmatpush.msra.mxu0 %v578
        %596 = vmatpush.msra.mxu0 %v577
        %597 = vmatpush.msra.mxu0 %v576
        %598 = vmatpush.msra.mxu0 %v575
        %599 = vmatpush.msra.mxu0 %v574
        %600 = vmatpush.msra.mxu0 %v573
        %601 = vmatpush.msra.mxu0 %v572
        %602 = vmatpush.msra.mxu0 %v571
        %603 = vmatmul.f32.gmra.mxu0 %v518
        %v604 = vpop.f32.mrf.mxu0
        %v605 = vadd.f32 0.0, %v604
        %606 = vmatmul.f32.gmra.mxu0 %v519
        %v607 = vpop.f32.mrf.mxu0
        %v608 = vadd.f32 0.0, %v607
        %609 = vdwg.mxu0
        %v610 = vld [vmem:[#allocation11] sm:$0xff]
        %v611 = vld [vmem:[#allocation11 + $0x8] sm:$0xff]
        %v612 = vld [vmem:[#allocation11 + $0x10] sm:$0xff]
        %v613 = vld [vmem:[#allocation11 + $0x18] sm:$0xff]
        %v614 = vld [vmem:[#allocation11 + $0x20] sm:$0xff]
        %v615 = vld [vmem:[#allocation11 + $0x28] sm:$0xff]
        %v616 = vld [vmem:[#allocation11 + $0x30] sm:$0xff]
        %v617 = vld [vmem:[#allocation11 + $0x38] sm:$0xff]
        %v618 = vld [vmem:[#allocation11 + $0x40] sm:$0xff]
        %v619 = vld [vmem:[#allocation11 + $0x48] sm:$0xff]
        %v620 = vld [vmem:[#allocation11 + $0x50] sm:$0xff]
        %v621 = vld [vmem:[#allocation11 + $0x58] sm:$0xff]
        %v622 = vld [vmem:[#allocation11 + $0x60] sm:$0xff]
        %v623 = vld [vmem:[#allocation11 + $0x68] sm:$0xff]
        %v624 = vld [vmem:[#allocation11 + $0x70] sm:$0xff]
        %v625 = vld [vmem:[#allocation11 + $0x78] sm:$0xff]
        %626 = vmatpush.msra.mxu0 %v625
        %627 = vmatpush.msra.mxu0 %v624
        %628 = vmatpush.msra.mxu0 %v623
        %629 = vmatpush.msra.mxu0 %v622
        %630 = vmatpush.msra.mxu0 %v621
        %631 = vmatpush.msra.mxu0 %v620
        %632 = vmatpush.msra.mxu0 %v619
        %633 = vmatpush.msra.mxu0 %v618
        %634 = vmatpush.msra.mxu0 %v617
        %635 = vmatpush.msra.mxu0 %v616
        %636 = vmatpush.msra.mxu0 %v615
        %637 = vmatpush.msra.mxu0 %v614
        %638 = vmatpush.msra.mxu0 %v613
        %639 = vmatpush.msra.mxu0 %v612
        %640 = vmatpush.msra.mxu0 %v611
        %641 = vmatpush.msra.mxu0 %v610
        %642 = vmatmul.f32.gmra.mxu0 %v520
        %v643 = vpop.f32.mrf.mxu0
        %v644 = vadd.f32 0.0, %v643
        %645 = vmatmul.f32.gmra.mxu0 %v521
        %v646 = vpop.f32.mrf.mxu0
        %v647 = vadd.f32 0.0, %v646
        %648 = vdwg.mxu0
        %v649 = vld [vmem:[#allocation10] sm:$0xff]
        %v650 = vld [vmem:[#allocation10 + $0x8] sm:$0xff]
        %v651 = vld [vmem:[#allocation10 + $0x10] sm:$0xff]
        %v652 = vld [vmem:[#allocation10 + $0x18] sm:$0xff]
        %v653 = vld [vmem:[#allocation10 + $0x20] sm:$0xff]
        %v654 = vld [vmem:[#allocation10 + $0x28] sm:$0xff]
        %v655 = vld [vmem:[#allocation10 + $0x30] sm:$0xff]
        %v656 = vld [vmem:[#allocation10 + $0x38] sm:$0xff]
        %v657 = vld [vmem:[#allocation10 + $0x40] sm:$0xff]
        %v658 = vld [vmem:[#allocation10 + $0x48] sm:$0xff]
        %v659 = vld [vmem:[#allocation10 + $0x50] sm:$0xff]
        %v660 = vld [vmem:[#allocation10 + $0x58] sm:$0xff]
        %v661 = vld [vmem:[#allocation10 + $0x60] sm:$0xff]
        %v662 = vld [vmem:[#allocation10 + $0x68] sm:$0xff]
        %v663 = vld [vmem:[#allocation10 + $0x70] sm:$0xff]
        %v664 = vld [vmem:[#allocation10 + $0x78] sm:$0xff]
        %665 = vmatpush.msra.mxu0 %v664
        %666 = vmatpush.msra.mxu0 %v663
        %667 = vmatpush.msra.mxu0 %v662
        %668 = vmatpush.msra.mxu0 %v661
        %669 = vmatpush.msra.mxu0 %v660
        %670 = vmatpush.msra.mxu0 %v659
        %671 = vmatpush.msra.mxu0 %v658
        %672 = vmatpush.msra.mxu0 %v657
        %673 = vmatpush.msra.mxu0 %v656
        %674 = vmatpush.msra.mxu0 %v655
        %675 = vmatpush.msra.mxu0 %v654
        %676 = vmatpush.msra.mxu0 %v653
        %677 = vmatpush.msra.mxu0 %v652
        %678 = vmatpush.msra.mxu0 %v651
        %679 = vmatpush.msra.mxu0 %v650
        %680 = vmatpush.msra.mxu0 %v649
        %681 = vmatmul.f32.gmra.mxu0 %v569
        %v682 = vpop.f32.mrf.mxu0
        %v683 = vadd.f32 0.0, %v682
        %684 = vdwg.mxu0
        %v685 = vld [vmem:[#allocation13] sm:$0xff]
        %v686 = vld [vmem:[#allocation13 + $0x8] sm:$0xff]
        %v687 = vld [vmem:[#allocation13 + $0x10] sm:$0xff]
        %v688 = vld [vmem:[#allocation13 + $0x18] sm:$0xff]
        %v689 = vld [vmem:[#allocation13 + $0x20] sm:$0xff]
        %v690 = vld [vmem:[#allocation13 + $0x28] sm:$0xff]
        %v691 = vld [vmem:[#allocation13 + $0x30] sm:$0xff]
        %v692 = vld [vmem:[#allocation13 + $0x38] sm:$0xff]
        %v693 = vld [vmem:[#allocation13 + $0x40] sm:$0xff]
        %v694 = vld [vmem:[#allocation13 + $0x48] sm:$0xff]
        %v695 = vld [vmem:[#allocation13 + $0x50] sm:$0xff]
        %v696 = vld [vmem:[#allocation13 + $0x58] sm:$0xff]
        %v697 = vld [vmem:[#allocation13 + $0x60] sm:$0xff]
        %v698 = vld [vmem:[#allocation13 + $0x68] sm:$0xff]
        %v699 = vld [vmem:[#allocation13 + $0x70] sm:$0xff]
        %v700 = vld [vmem:[#allocation13 + $0x78] sm:$0xff]
        %701 = vmatpush.msra.mxu0 %v700
        %702 = vmatpush.msra.mxu0 %v699
        %703 = vmatpush.msra.mxu0 %v698
        %704 = vmatpush.msra.mxu0 %v697
        %705 = vmatpush.msra.mxu0 %v696
        %706 = vmatpush.msra.mxu0 %v695
        %707 = vmatpush.msra.mxu0 %v694
        %708 = vmatpush.msra.mxu0 %v693
        %709 = vmatpush.msra.mxu0 %v692
        %710 = vmatpush.msra.mxu0 %v691
        %711 = vmatpush.msra.mxu0 %v690
        %712 = vmatpush.msra.mxu0 %v689
        %713 = vmatpush.msra.mxu0 %v688
        %714 = vmatpush.msra.mxu0 %v687
        %715 = vmatpush.msra.mxu0 %v686
        %716 = vmatpush.msra.mxu0 %v685
        %717 = vmatmul.f32.gmra.mxu0 %v546
        %v718 = vpop.f32.mrf.mxu0
        %v719 = vadd.f32 0.0, %v718
        %720 = vdwg.mxu0
        %v721 = vperm.slane %v683, 0
        %v722 = vadd.f32 %v605, %v721
        %v723 = vadd.f32 %v608, %v721
        %v724 = vperm.slane %v719, 0
        %v725 = vadd.f32 %v644, %v724
        %v726 = vadd.f32 %v647, %v724
        %727 = vst [vmem:[%s507] sm:$0xff] %v722
        %728 = vst [vmem:[%s507 + $0x8] sm:$0xff] %v723
        %729 = vst [vmem:[%s514] sm:$0xff] %v725
        %730 = vst [vmem:[%s514 + $0x8] sm:$0xff] %v726
        %s731 = sand.u32 %s231, 1
        %s732 = scalar_lea.sflag [#allocation4], %s731
        %s733 = sand.u32 %s231, 1
        %s734 = smul.addr %s733, 16
        %s735 = scalar_lea.vmem [#allocation14], %s734
        %s736 = sand.u32 %s257, 1
        %s737 = scalar_lea.sflag [#allocation16], %s736
        %s738 = sand.u32 %s257, 1
        %s739 = smul.addr %s738, 16
        %s740 = scalar_lea.vmem [#allocation15], %s739
        // Predicated region
        $region81: #{tpu_custom_call.1} parent=51 // pred_check
          %p741 = pneg %p241
        $region82: #{tpu_custom_call.1} parent=51 // pred_check_branch
          %743 = sbr.rel (%p741) target = $region84
        $region83: #{tpu_custom_call.1} parent=51 // pred_region
          %745 = vsyncadd %s732, 0
          %s746 = smul.addr %s35, 2
          %s747 = smul.addr %s746, 8
          %s748 = scalar_lea.hbm %s8, %s747
          %s749 = sshll.u32 %s735, 4
          %s750 = int_to_ptr.vmem [resolvable:$true] %s749
          %s751 = sshll.u32 %s748, 4
          %s752 = int_to_ptr.hbm [resolvable:$true] %s751
          %757 = dma.vmem_to_hbm [thread:$0]  %s750, 256, %s752, %s732, 128, 128, 8
        $region84: #{tpu_custom_call.1} parent=51 // pred_fallthru
          _
        // Predicated region
        $region85: #{tpu_custom_call.1} parent=51 // pred_check
          %p758 = pneg %p267
        $region86: #{tpu_custom_call.1} parent=51 // pred_check_branch
          %760 = sbr.rel (%p758) target = $region88
        $region87: #{tpu_custom_call.1} parent=51 // pred_region
          %762 = vsyncadd %s737, 0
          %s763 = smul.addr %s35, 2
          %s764 = smul.addr %s763, 8
          %s765 = scalar_lea.hbm %s9, %s764
          %s766 = sshll.u32 %s740, 4
          %s767 = int_to_ptr.vmem [resolvable:$true] %s766
          %s768 = sshll.u32 %s765, 4
          %s769 = int_to_ptr.hbm [resolvable:$true] %s768
          %774 = dma.vmem_to_hbm [thread:$0]  %s767, 256, %s769, %s737, 128, 128, 8
        $region88: #{tpu_custom_call.1} parent=51 // pred_fallthru
          _
      $region52: #{tpu_custom_call.1} parent=5 // pred_fallthru
        _
      %p775 = scmp.le.s32.totalorder 2, %s30
      // Predicated region
      $region89: #{tpu_custom_call.1} parent=5 // pred_check
        %p776 = pneg %p775
      $region90: #{tpu_custom_call.1} parent=5 // pred_check_branch
        %778 = sbr.rel (%p776) target = $region92
      $region91: #{tpu_custom_call.1} parent=5 // pred_region
        %s779 = ssub.s32 %s30, 2
        // Predicated region
        $region93: #{tpu_custom_call.1} parent=91 // pred_check
          %p780 = pneg %p247
        $region94: #{tpu_custom_call.1} parent=91 // pred_check_branch
          %782 = sbr.rel (%p780) target = $region96
        $region95: #{tpu_custom_call.1} parent=91 // pred_region
          %s783 = sand.u32 %s232, 1
          %s784 = scalar_lea.sflag [#allocation4], %s783
          %s785 = sand.u32 %s232, 1
          %s786 = smul.addr %s785, 16
          %s787 = scalar_lea.vmem [#allocation14], %s786
          %789 = dma.done %s784, 256
        $region96: #{tpu_custom_call.1} parent=91 // pred_fallthru
          _
        // Predicated region
        $region97: #{tpu_custom_call.1} parent=91 // pred_check
          %p790 = pneg %p273
        $region98: #{tpu_custom_call.1} parent=91 // pred_check_branch
          %792 = sbr.rel (%p790) target = $region100
        $region99: #{tpu_custom_call.1} parent=91 // pred_region
          %s793 = sand.u32 %s258, 1
          %s794 = scalar_lea.sflag [#allocation16], %s793
          %s795 = sand.u32 %s258, 1
          %s796 = smul.addr %s795, 16
          %s797 = scalar_lea.vmem [#allocation15], %s796
          %799 = dma.done %s794, 256
        $region100: #{tpu_custom_call.1} parent=91 // pred_fallthru
          _
      $region92: #{tpu_custom_call.1} parent=5 // pred_fallthru
        _
    $region6: #{tpu_custom_call.1} parent=1 // loop_footer
      %s34 = sadd.s32 1, %s30
    $region7: #{tpu_custom_call.1} parent=1 // loop_footer_branch
      %29 = sbr.rel target = $region3
    $region8: #{tpu_custom_call.1} parent=1 // loop_exit
      _
    %800 = vsyncpa [#allocation3], 1
    %s801 = scalar_lea.sflag [#allocation3], 1
    %802 = vsyncpa %s801, 1
    %803 = vsyncpa [#allocation6], 1
    %s804 = scalar_lea.sflag [#allocation6], 1
    %805 = vsyncpa %s804, 1
    %806 = vsyncpa [#allocation9], 1
    %807 = vsyncpa [#allocation12], 1
    %808 = vsyncpa [#allocation4], 1
    %s809 = scalar_lea.sflag [#allocation4], 1
    %810 = vsyncpa %s809, 1
    %811 = vsyncpa [#allocation16], 1
    %s812 = scalar_lea.sflag [#allocation16], 1
    %813 = vsyncpa %s812, 1

// kernel: tpu_custom_call.1
$region0: #{tpu_custom_call.1}
  #allocation0 [shape = 'u32[]', space=smem, size = 0x4, offset = 0x4, fixed_abs, tag = 'smem constant byte address 0x4 - core index']
  #allocation1 [shape = 'u32[72,128]{1,0:T(1,128)}', space=vmem, size = 0x9000, scoped, tag = 'internal scratch']
  %s0 = inlined_call_operand.hbm [shape: f32[2,16,128], index: 0, kind: input, shape index: {}]
  %s1 = inlined_call_operand.hbm [shape: f32[2,16,128], index: 1, kind: input, shape index: {}]
  %s2 = inlined_call_operand.hbm [shape: f32[2,1,16], index: 2, kind: input, shape index: {}]
  %s3 = inlined_call_operand.vmem [shape: f32[2,1,16], index: 3, kind: input, shape index: {}]
  %s4 = inlined_call_operand.hbm [shape: f32[128,128], index: 4, kind: input, shape index: {}]
  %s5 = inlined_call_operand.hbm [shape: f32[128,128], index: 5, kind: input, shape index: {}]
  %s6 = inlined_call_operand.hbm [shape: f32[128,128], index: 6, kind: input, shape index: {}]
  %s7 = inlined_call_operand.hbm [shape: f32[128,128], index: 7, kind: input, shape index: {}]
  %s8 = inlined_call_operand.hbm [shape: f32[2,16,128], index: 8, kind: output, shape index: {0}]
  %s9 = inlined_call_operand.hbm [shape: f32[2,16,128], index: 9, kind: output, shape index: {1}]
  %10 = xla_tuple %s8, %s9
  %s11 = sld [smem:[#allocation0]]
  $region101: #{tpu_custom_call.1} parent=0
    _
  %s13 = ssub.s32 1, %s11
  %s14 = scalar_select 0, %s13, %s11
  $region1: #{tpu_custom_call.1} parent=0
    #allocation2 [shape = 'u8[16384]{0}', space=vmem, size = 0x4000, scoped, tag = 'input window, operand 0']
    #allocation3 [shape = 's32[2]{0}', space=sflag, size = 0x8, scoped, tag = 'scoped memory for tpu_custom_call.1']
    #allocation4 [shape = 's32[2]{0}', space=sflag, size = 0x8, scoped, tag = 'scoped memory for tpu_custom_call.1']
    #allocation5 [shape = 'u8[16384]{0}', space=vmem, size = 0x4000, scoped, tag = 'input window, operand 1']
    #allocation6 [shape = 's32[2]{0}', space=sflag, size = 0x8, scoped, tag = 'scoped memory for tpu_custom_call.1']
    #allocation7 [shape = 'u8[1024]{0}', space=vmem, size = 0x400, scoped, tag = 'input window, operand 2']
    #allocation8 [shape = 'u8[65536]{0}', space=vmem, size = 0x10000, scoped, tag = 'input window, operand 4, single buffered']
    #allocation9 [shape = 's32[1]{0}', space=sflag, size = 0x4, scoped, tag = 'scoped memory for tpu_custom_call.1']
    #allocation10 [shape = 'u8[65536]{0}', space=vmem, size = 0x10000, scoped, tag = 'input window, operand 5, single buffered']
    #allocation11 [shape = 'u8[65536]{0}', space=vmem, size = 0x10000, scoped, tag = 'input window, operand 6, single buffered']
    #allocation12 [shape = 's32[1]{0}', space=sflag, size = 0x4, scoped, tag = 'scoped memory for tpu_custom_call.1']
    #allocation13 [shape = 'u8[65536]{0}', space=vmem, size = 0x10000, scoped, tag = 'input window, operand 7, single buffered']
    #allocation14 [shape = 'u8[16384]{0}', space=vmem, size = 0x4000, scoped, tag = 'output window, operand 0']
    #allocation15 [shape = 'u8[16384]{0}', space=vmem, size = 0x4000, scoped, tag = 'output window, operand 1']
    #allocation16 [shape = 's32[2]{0}', space=sflag, size = 0x8, scoped, tag = 'scoped memory for tpu_custom_call.1']
    %15 = vsyncpa [#allocation3], 0
    %s16 = scalar_lea.sflag [#allocation3], 1
    %17 = vsyncpa %s16, 0
    %18 = vsyncpa [#allocation6], 0
    %s19 = scalar_lea.sflag [#allocation6], 1
    %20 = vsyncpa %s19, 0
    %21 = vsyncpa [#allocation9], 0
    %22 = vsyncpa [#allocation12], 0
    %23 = vsyncpa [#allocation4], 0
    %s24 = scalar_lea.sflag [#allocation4], 1
    %25 = vsyncpa %s24, 0
    %26 = vsyncpa [#allocation16], 0
    %s27 = scalar_lea.sflag [#allocation16], 1
    %28 = vsyncpa %s27, 0
    loop: start=0, step=1, limit=4
    $region2: #{tpu_custom_call.1} parent=1 // loop_pre_header
      _
    $region3: #{tpu_custom_call.1} parent=1 // loop_header
      %s30 = sphi 0, %s34
      %p31 = scmp.ge.s32.totalorder %s30, 4
      %s40 = sphi 0, %s42
      %s43 = sphi 0, %s40
      %s44 = sphi 0, %s43
      %s60 = sphi 0, %s44
      %s66 = sphi 0, %s68
      %s69 = sphi 0, %s66
      %s70 = sphi 0, %s69
      %s86 = sphi 0, %s70
      %s92 = sphi 0, %s94
      %s95 = sphi 0, %s92
      %s96 = sphi 0, %s95
      %s112 = sphi 0, %s96
      %s118 = sphi 0, %s120
      %s121 = sphi 0, %s118
      %s122 = sphi 0, %s121
      %s138 = sphi 0, %s122
      %s142 = sphi 0, %s142
      %s144 = sphi 0, %s142
      %s145 = sphi 0, %s144
      %s159 = sphi 0, %s145
      %s163 = sphi 0, %s163
      %s165 = sphi 0, %s163
      %s166 = sphi 0, %s165
      %s180 = sphi 0, %s166
      %s184 = sphi 0, %s184
      %s186 = sphi 0, %s184
      %s187 = sphi 0, %s186
      %s201 = sphi 0, %s187
      %s205 = sphi 0, %s205
      %s207 = sphi 0, %s205
      %s208 = sphi 0, %s207
      %s222 = sphi 0, %s208
      %s228 = sphi 0, %s230
      %s231 = sphi 0, %s228
      %s232 = sphi 0, %s231
      %s248 = sphi 0, %s232
      %s254 = sphi 0, %s256
      %s257 = sphi 0, %s254
      %s258 = sphi 0, %s257
      %s274 = sphi 0, %s258
    $region4: #{tpu_custom_call.1} parent=1 // loop_header_branch
      %33 = sbr.rel (%p31) target = $region8
    $region5: #{tpu_custom_call.1} parent=1 // loop_body
      %s35 = ssub.s32 %s30, 1
      %s36 = ssub.s32 %s30, 2
      %s37 = sadd.s32 %s30, 1
      %s38 = ssub.s32 %s30, %s37
      %p39 = scmp.eq.s32.totalorder %s38, 0
      %s41 = sadd.s32 %s40, 1
      %s42 = scalar_select %p39, %s40, %s41
      %p45 = pneg %p39
      %p46 = scmp.eq.s32.totalorder %s30, 1
      %p47 = por %p45, %p46
      %p48 = scmp.ne.s32.totalorder %s40, %s43
      %p49 = scmp.eq.s32.totalorder %s30, 0
      %p50 = por %p48, %p49
      %p51 = scmp.ne.s32.totalorder %s40, %s43
      %p52 = scmp.eq.s32.totalorder %s35, 1
      %p53 = por %p51, %p52
      %p54 = scmp.ne.s32.totalorder %s43, %s44
      %p55 = scmp.eq.s32.totalorder %s35, 0
      %p56 = por %p54, %p55
      %p57 = scmp.ne.s32.totalorder %s43, %s44
      %p58 = scmp.eq.s32.totalorder %s36, 1
      %p59 = por %p57, %p58
      %p61 = scmp.ne.s32.totalorder %s44, %s60
      %p62 = scmp.eq.s32.totalorder %s36, 0
      %p63 = por %p61, %p62
      %s64 = ssub.s32 %s30, %s37
      %p65 = scmp.eq.s32.totalorder %s64, 0
      %s67 = sadd.s32 %s66, 1
      %s68 = scalar_select %p65, %s66, %s67
      %p71 = pneg %p65
      %p72 = scmp.eq.s32.totalorder %s30, 1
      %p73 = por %p71, %p72
      %p74 = scmp.ne.s32.totalorder %s66, %s69
      %p75 = scmp.eq.s32.totalorder %s30, 0
      %p76 = por %p74, %p75
      %p77 = scmp.ne.s32.totalorder %s66, %s69
      %p78 = scmp.eq.s32.totalorder %s35, 1
      %p79 = por %p77, %p78
      %p80 = scmp.ne.s32.totalorder %s69, %s70
      %p81 = scmp.eq.s32.totalorder %s35, 0
      %p82 = por %p80, %p81
      %p83 = scmp.ne.s32.totalorder %s69, %s70
      %p84 = scmp.eq.s32.totalorder %s36, 1
      %p85 = por %p83, %p84
      %p87 = scmp.ne.s32.totalorder %s70, %s86
      %p88 = scmp.eq.s32.totalorder %s36, 0
      %p89 = por %p87, %p88
      %s90 = ssub.s32 %s30, %s37
      %p91 = scmp.eq.s32.totalorder %s90, 0
      %s93 = sadd.s32 %s92, 1
      %s94 = scalar_select %p91, %s92, %s93
      %p97 = pneg %p91
      %p98 = scmp.eq.s32.totalorder %s30, 1
      %p99 = por %p97, %p98
      %p100 = scmp.ne.s32.totalorder %s92, %s95
      %p101 = scmp.eq.s32.totalorder %s30, 0
      %p102 = por %p100, %p101
      %p103 = scmp.ne.s32.totalorder %s92, %s95
      %p104 = scmp.eq.s32.totalorder %s35, 1
      %p105 = por %p103, %p104
      %p106 = scmp.ne.s32.totalorder %s95, %s96
      %p107 = scmp.eq.s32.totalorder %s35, 0
      %p108 = por %p106, %p107
      %p109 = scmp.ne.s32.totalorder %s95, %s96
      %p110 = scmp.eq.s32.totalorder %s36, 1
      %p111 = por %p109, %p110
      %p113 = scmp.ne.s32.totalorder %s96, %s112
      %p114 = scmp.eq.s32.totalorder %s36, 0
      %p115 = por %p113, %p114
      %s116 = ssub.s32 %s30, %s37
      %p117 = scmp.eq.s32.totalorder %s116, 0
      %s119 = sadd.s32 %s118, 1
      %s120 = scalar_select %p117, %s118, %s119
      %p123 = pneg %p117
      %p124 = scmp.eq.s32.totalorder %s30, 1
      %p125 = por %p123, %p124
      %p126 = scmp.ne.s32.totalorder %s118, %s121
      %p127 = scmp.eq.s32.totalorder %s30, 0
      %p128 = por %p126, %p127
      %p129 = scmp.ne.s32.totalorder %s118, %s121
      %p130 = scmp.eq.s32.totalorder %s35, 1
      %p131 = por %p129, %p130
      %p132 = scmp.ne.s32.totalorder %s121, %s122
      %p133 = scmp.eq.s32.totalorder %s35, 0
      %p134 = por %p132, %p133
      %p135 = scmp.ne.s32.totalorder %s121, %s122
      %p136 = scmp.eq.s32.totalorder %s36, 1
      %p137 = por %p135, %p136
      %p139 = scmp.ne.s32.totalorder %s122, %s138
      %p140 = scmp.eq.s32.totalorder %s36, 0
      %p141 = por %p139, %p140
      %s143 = sadd.s32 %s142, 1
      %p146 = scmp.eq.s32.totalorder %s30, 1
      %p147 = scmp.ne.s32.totalorder %s142, %s144
      %p148 = scmp.eq.s32.totalorder %s30, 0
      %p149 = por %p147, %p148
      %p150 = scmp.ne.s32.totalorder %s142, %s144
      %p151 = scmp.eq.s32.totalorder %s35, 1
      %p152 = por %p150, %p151
      %p153 = scmp.ne.s32.totalorder %s144, %s145
      %p154 = scmp.eq.s32.totalorder %s35, 0
      %p155 = por %p153, %p154
      %p156 = scmp.ne.s32.totalorder %s144, %s145
      %p157 = scmp.eq.s32.totalorder %s36, 1
      %p158 = por %p156, %p157
      %p160 = scmp.ne.s32.totalorder %s145, %s159
      %p161 = scmp.eq.s32.totalorder %s36, 0
      %p162 = por %p160, %p161
      %s164 = sadd.s32 %s163, 1
      %p167 = scmp.eq.s32.totalorder %s30, 1
      %p168 = scmp.ne.s32.totalorder %s163, %s165
      %p169 = scmp.eq.s32.totalorder %s30, 0
      %p170 = por %p168, %p169
      %p171 = scmp.ne.s32.totalorder %s163, %s165
      %p172 = scmp.eq.s32.totalorder %s35, 1
      %p173 = por %p171, %p172
      %p174 = scmp.ne.s32.totalorder %s165, %s166
      %p175 = scmp.eq.s32.totalorder %s35, 0
      %p176 = por %p174, %p175
      %p177 = scmp.ne.s32.totalorder %s165, %s166
      %p178 = scmp.eq.s32.totalorder %s36, 1
      %p179 = por %p177, %p178
      %p181 = scmp.ne.s32.totalorder %s166, %s180
      %p182 = scmp.eq.s32.totalorder %s36, 0
      %p183 = por %p181, %p182
      %s185 = sadd.s32 %s184, 1
      %p188 = scmp.eq.s32.totalorder %s30, 1
      %p189 = scmp.ne.s32.totalorder %s184, %s186
      %p190 = scmp.eq.s32.totalorder %s30, 0
      %p191 = por %p189, %p190
      %p192 = scmp.ne.s32.totalorder %s184, %s186
      %p193 = scmp.eq.s32.totalorder %s35, 1
      %p194 = por %p192, %p193
      %p195 = scmp.ne.s32.totalorder %s186, %s187
      %p196 = scmp.eq.s32.totalorder %s35, 0
      %p197 = por %p195, %p196
      %p198 = scmp.ne.s32.totalorder %s186, %s187
      %p199 = scmp.eq.s32.totalorder %s36, 1
      %p200 = por %p198, %p199
      %p202 = scmp.ne.s32.totalorder %s187, %s201
      %p203 = scmp.eq.s32.totalorder %s36, 0
      %p204 = por %p202, %p203
      %s206 = sadd.s32 %s205, 1
      %p209 = scmp.eq.s32.totalorder %s30, 1
      %p210 = scmp.ne.s32.totalorder %s205, %s207
      %p211 = scmp.eq.s32.totalorder %s30, 0
      %p212 = por %p210, %p211
      %p213 = scmp.ne.s32.totalorder %s205, %s207
      %p214 = scmp.eq.s32.totalorder %s35, 1
      %p215 = por %p213, %p214
      %p216 = scmp.ne.s32.totalorder %s207, %s208
      %p217 = scmp.eq.s32.totalorder %s35, 0
      %p218 = por %p216, %p217
      %p219 = scmp.ne.s32.totalorder %s207, %s208
      %p220 = scmp.eq.s32.totalorder %s36, 1
      %p221 = por %p219, %p220
      %p223 = scmp.ne.s32.totalorder %s208, %s222
      %p224 = scmp.eq.s32.totalorder %s36, 0
      %p225 = por %p223, %p224
      %s226 = ssub.s32 %s30, %s37
      %p227 = scmp.eq.s32.totalorder %s226, 0
      %s229 = sadd.s32 %s228, 1
      %s230 = scalar_select %p227, %s228, %s229
      %p233 = pneg %p227
      %p234 = scmp.eq.s32.totalorder %s30, 1
      %p235 = por %p233, %p234
      %p236 = scmp.ne.s32.totalorder %s228, %s231
      %p237 = scmp.eq.s32.totalorder %s30, 0
      %p238 = por %p236, %p237
      %p239 = scmp.ne.s32.totalorder %s228, %s231
      %p240 = scmp.eq.s32.totalorder %s35, 1
      %p241 = por %p239, %p240
      %p242 = scmp.ne.s32.totalorder %s231, %s232
      %p243 = scmp.eq.s32.totalorder %s35, 0
      %p244 = por %p242, %p243
      %p245 = scmp.ne.s32.totalorder %s231, %s232
      %p246 = scmp.eq.s32.totalorder %s36, 1
      %p247 = por %p245, %p246
      %p249 = scmp.ne.s32.totalorder %s232, %s248
      %p250 = scmp.eq.s32.totalorder %s36, 0
      %p251 = por %p249, %p250
      %s252 = ssub.s32 %s30, %s37
      %p253 = scmp.eq.s32.totalorder %s252, 0
      %s255 = sadd.s32 %s254, 1
      %s256 = scalar_select %p253, %s254, %s255
      %p259 = pneg %p253
      %p260 = scmp.eq.s32.totalorder %s30, 1
      %p261 = por %p259, %p260
      %p262 = scmp.ne.s32.totalorder %s254, %s257
      %p263 = scmp.eq.s32.totalorder %s30, 0
      %p264 = por %p262, %p263
      %p265 = scmp.ne.s32.totalorder %s254, %s257
      %p266 = scmp.eq.s32.totalorder %s35, 1
      %p267 = por %p265, %p266
      %p268 = scmp.ne.s32.totalorder %s257, %s258
      %p269 = scmp.eq.s32.totalorder %s35, 0
      %p270 = por %p268, %p269
      %p271 = scmp.ne.s32.totalorder %s257, %s258
      %p272 = scmp.eq.s32.totalorder %s36, 1
      %p273 = por %p271, %p272
      %p275 = scmp.ne.s32.totalorder %s258, %s274
      %p276 = scmp.eq.s32.totalorder %s36, 0
      %p277 = por %p275, %p276
      %p278 = scmp.le.s32.totalorder 1, %s30
      %p279 = scmp.lt.s32.totalorder %s30, 3
      %p280 = pnand %p278, %p279
      %p281 = pneg %p280
      // Predicated region
      $region9: #{tpu_custom_call.1} parent=5 // pred_check
        _
      $region10: #{tpu_custom_call.1} parent=5 // pred_check_branch
        %283 = sbr.rel (%p280) target = $region12
      $region11: #{tpu_custom_call.1} parent=5 // pred_region
        %s284 = ssub.s32 %s30, 1
        // Predicated region
        $region13: #{tpu_custom_call.1} parent=11 // pred_check
          %p285 = pneg %p155
        $region14: #{tpu_custom_call.1} parent=11 // pred_check_branch
          %287 = sbr.rel (%p285) target = $region16
        $region15: #{tpu_custom_call.1} parent=11 // pred_region
          %289 = vsyncadd [#allocation9], 0
          %s290 = sshll.u32 %s4, 4
          %s291 = int_to_ptr.hbm [resolvable:$true] %s290
          %s292 = sshll.u32 [#allocation8], 4
          %s293 = int_to_ptr.vmem [resolvable:$true] %s292
          %298 = dma.hbm_to_vmem [thread:$0]  %s291, 2048, %s293, [#allocation9], 128, 128, 8
        $region16: #{tpu_custom_call.1} parent=11 // pred_fallthru
          _
        // Predicated region
        $region17: #{tpu_custom_call.1} parent=11 // pred_check
          %p299 = pneg %p176
        $region18: #{tpu_custom_call.1} parent=11 // pred_check_branch
          %301 = sbr.rel (%p299) target = $region20
        $region19: #{tpu_custom_call.1} parent=11 // pred_region
          %303 = vsyncadd [#allocation9], 0
          %s304 = sshll.u32 %s5, 4
          %s305 = int_to_ptr.hbm [resolvable:$true] %s304
          %s306 = sshll.u32 [#allocation10], 4
          %s307 = int_to_ptr.vmem [resolvable:$true] %s306
          %312 = dma.hbm_to_vmem [thread:$0]  %s305, 2048, %s307, [#allocation9], 128, 128, 8
        $region20: #{tpu_custom_call.1} parent=11 // pred_fallthru
          _
        // Predicated region
        $region21: #{tpu_custom_call.1} parent=11 // pred_check
          %p313 = pneg %p197
        $region22: #{tpu_custom_call.1} parent=11 // pred_check_branch
          %315 = sbr.rel (%p313) target = $region24
        $region23: #{tpu_custom_call.1} parent=11 // pred_region
          %317 = vsyncadd [#allocation12], 0
          %s318 = sshll.u32 %s6, 4
          %s319 = int_to_ptr.hbm [resolvable:$true] %s318
          %s320 = sshll.u32 [#allocation11], 4
          %s321 = int_to_ptr.vmem [resolvable:$true] %s320
          %326 = dma.hbm_to_vmem [thread:$0]  %s319, 2048, %s321, [#allocation12], 128, 128, 8
        $region24: #{tpu_custom_call.1} parent=11 // pred_fallthru
          _
        // Predicated region
        $region25: #{tpu_custom_call.1} parent=11 // pred_check
          %p327 = pneg %p218
        $region26: #{tpu_custom_call.1} parent=11 // pred_check_branch
          %329 = sbr.rel (%p327) target = $region28
        $region27: #{tpu_custom_call.1} parent=11 // pred_region
          %331 = vsyncadd [#allocation12], 0
          %s332 = sshll.u32 %s7, 4
          %s333 = int_to_ptr.hbm [resolvable:$true] %s332
          %s334 = sshll.u32 [#allocation13], 4
          %s335 = int_to_ptr.vmem [resolvable:$true] %s334
          %340 = dma.hbm_to_vmem [thread:$0]  %s333, 2048, %s335, [#allocation12], 128, 128, 8
        $region28: #{tpu_custom_call.1} parent=11 // pred_fallthru
          _
      $region12: #{tpu_custom_call.1} parent=5 // pred_fallthru
        _
      %p341 = scmp.lt.s32.totalorder %s30, 2
      // Predicated region
      $region29: #{tpu_custom_call.1} parent=5 // pred_check
        %p342 = pneg %p341
      $region30: #{tpu_custom_call.1} parent=5 // pred_check_branch
        %344 = sbr.rel (%p342) target = $region32
      $region31: #{tpu_custom_call.1} parent=5 // pred_region
        // Predicated region
        $region33: #{tpu_custom_call.1} parent=31 // pred_check
          %p345 = pneg %p50
        $region34: #{tpu_custom_call.1} parent=31 // pred_check_branch
          %347 = sbr.rel (%p345) target = $region36
        $region35: #{tpu_custom_call.1} parent=31 // pred_region
          %s348 = sand.u32 %s40, 1
          %s349 = scalar_lea.sflag [#allocation3], %s348
          %s350 = sand.u32 %s40, 1
          %s351 = smul.addr %s350, 16
          %s352 = scalar_lea.vmem [#allocation2], %s351
          %354 = vsyncadd %s349, 0
          %s355 = smul.addr %s30, 2
          %s356 = smul.addr %s355, 8
          %s357 = scalar_lea.hbm %s0, %s356
          %s358 = sshll.u32 %s357, 4
          %s359 = int_to_ptr.hbm [resolvable:$true] %s358
          %s360 = sshll.u32 %s352, 4
          %s361 = int_to_ptr.vmem [resolvable:$true] %s360
          %366 = dma.hbm_to_vmem [thread:$0]  %s359, 256, %s361, %s349, 128, 128, 8
        $region36: #{tpu_custom_call.1} parent=31 // pred_fallthru
          _
        // Predicated region
        $region37: #{tpu_custom_call.1} parent=31 // pred_check
          %p367 = pneg %p76
        $region38: #{tpu_custom_call.1} parent=31 // pred_check_branch
          %369 = sbr.rel (%p367) target = $region40
        $region39: #{tpu_custom_call.1} parent=31 // pred_region
          %s370 = sand.u32 %s30, 1
          %s371 = scalar_lea.sflag [#allocation6], %s370
          %s372 = sand.u32 %s66, 1
          %s373 = smul.addr %s372, 16
          %s374 = scalar_lea.vmem [#allocation5], %s373
          %376 = vsyncadd %s371, 0
          %s377 = smul.addr %s30, 2
          %s378 = smul.addr %s377, 8
          %s379 = scalar_lea.hbm %s1, %s378
          %s380 = sshll.u32 %s379, 4
          %s381 = int_to_ptr.hbm [resolvable:$true] %s380
          %s382 = sshll.u32 %s374, 4
          %s383 = int_to_ptr.vmem [resolvable:$true] %s382
          %388 = dma.hbm_to_vmem [thread:$0]  %s381, 256, %s383, %s371, 128, 128, 8
        $region40: #{tpu_custom_call.1} parent=31 // pred_fallthru
          _
        // Predicated region
        $region41: #{tpu_custom_call.1} parent=31 // pred_check
          %p389 = pneg %p102
        $region42: #{tpu_custom_call.1} parent=31 // pred_check_branch
          %391 = sbr.rel (%p389) target = $region44
        $region43: #{tpu_custom_call.1} parent=31 // pred_region
          %s392 = sand.u32 %s30, 1
          %s393 = scalar_lea.sflag [#allocation6], %s392
          %s394 = sand.u32 %s92, 1
          %s395 = scalar_lea.vmem [#allocation7], %s394
          %397 = vsyncadd %s393, 0
          %s398 = scalar_lea.hbm %s2, %s30
          %s400 = sshll.u32 %s398, 4
          %s401 = int_to_ptr.hbm [resolvable:$true] %s400
          %s402 = sshll.u32 %s395, 4
          %s403 = int_to_ptr.vmem [resolvable:$true] %s402
          %405 = dma.hbm_to_vmem [thread:$0]  %s401, 16, %s403, %s393
        $region44: #{tpu_custom_call.1} parent=31 // pred_fallthru
          _
        // Predicated region
        $region45: #{tpu_custom_call.1} parent=31 // pred_check
          %p406 = pneg %p128
        $region46: #{tpu_custom_call.1} parent=31 // pred_check_branch
          %408 = sbr.rel (%p406) target = $region48
        $region47: #{tpu_custom_call.1} parent=31 // pred_region
          %p409 = scmp.lt.s32.totalorder %s30, 1
          %s410 = scalar_select %p409, %s30, 1
          %s411 = scalar_lea.vmem %s3, %s410
        $region48: #{tpu_custom_call.1} parent=31 // pred_fallthru
          _
      $region32: #{tpu_custom_call.1} parent=5 // pred_fallthru
        _
      %p412 = scmp.le.s32.totalorder 1, %s30
      %p413 = scmp.lt.s32.totalorder %s30, 3
      %p414 = pnand %p412, %p413
      %p415 = pneg %p414
      // Predicated region
      $region49: #{tpu_custom_call.1} parent=5 // pred_check
        _
      $region50: #{tpu_custom_call.1} parent=5 // pred_check_branch
        %417 = sbr.rel (%p414) target = $region52
      $region51: #{tpu_custom_call.1} parent=5 // pred_region
        %s418 = ssub.s32 %s30, 1
        %s419 = sand.u32 %s43, 1
        %s420 = scalar_lea.sflag [#allocation3], %s419
        %s421 = sand.u32 %s43, 1
        %s422 = smul.addr %s421, 16
        %s423 = scalar_lea.vmem [#allocation2], %s422
        // Predicated region
        $region53: #{tpu_custom_call.1} parent=51 // pred_check
          %p424 = pneg %p56
        $region54: #{tpu_custom_call.1} parent=51 // pred_check_branch
          %426 = sbr.rel (%p424) target = $region56
        $region55: #{tpu_custom_call.1} parent=51 // pred_region
          %428 = dma.done %s420, 256
        $region56: #{tpu_custom_call.1} parent=51 // pred_fallthru
          _
        %s429 = sand.u32 %s35, 1
        %s430 = scalar_lea.sflag [#allocation6], %s429
        %s431 = sand.u32 %s69, 1
        %s432 = smul.addr %s431, 16
        %s433 = scalar_lea.vmem [#allocation5], %s432
        // Predicated region
        $region57: #{tpu_custom_call.1} parent=51 // pred_check
          %p434 = pneg %p82
        $region58: #{tpu_custom_call.1} parent=51 // pred_check_branch
          %436 = sbr.rel (%p434) target = $region60
        $region59: #{tpu_custom_call.1} parent=51 // pred_region
          %438 = dma.done %s430, 256
        $region60: #{tpu_custom_call.1} parent=51 // pred_fallthru
          _
        %s439 = sand.u32 %s35, 1
        %s440 = scalar_lea.sflag [#allocation6], %s439
        %s441 = sand.u32 %s95, 1
        %s442 = scalar_lea.vmem [#allocation7], %s441
        // Predicated region
        $region61: #{tpu_custom_call.1} parent=51 // pred_check
          %p443 = pneg %p108
        $region62: #{tpu_custom_call.1} parent=51 // pred_check_branch
          %445 = sbr.rel (%p443) target = $region64
        $region63: #{tpu_custom_call.1} parent=51 // pred_region
          %447 = dma.done %s440, 16
        $region64: #{tpu_custom_call.1} parent=51 // pred_fallthru
          _
        // Predicated region
        $region65: #{tpu_custom_call.1} parent=51 // pred_check
          %p448 = pneg %p155
        $region66: #{tpu_custom_call.1} parent=51 // pred_check_branch
          %450 = sbr.rel (%p448) target = $region68
        $region67: #{tpu_custom_call.1} parent=51 // pred_region
          %452 = dma.done [#allocation9], 2048
        $region68: #{tpu_custom_call.1} parent=51 // pred_fallthru
          _
        // Predicated region
        $region69: #{tpu_custom_call.1} parent=51 // pred_check
          %p453 = pneg %p176
        $region70: #{tpu_custom_call.1} parent=51 // pred_check_branch
          %455 = sbr.rel (%p453) target = $region72
        $region71: #{tpu_custom_call.1} parent=51 // pred_region
          %457 = dma.done [#allocation9], 2048
        $region72: #{tpu_custom_call.1} parent=51 // pred_fallthru
          _
        // Predicated region
        $region73: #{tpu_custom_call.1} parent=51 // pred_check
          %p458 = pneg %p197
        $region74: #{tpu_custom_call.1} parent=51 // pred_check_branch
          %460 = sbr.rel (%p458) target = $region76
        $region75: #{tpu_custom_call.1} parent=51 // pred_region
          %462 = dma.done [#allocation12], 2048
        $region76: #{tpu_custom_call.1} parent=51 // pred_fallthru
          _
        // Predicated region
        $region77: #{tpu_custom_call.1} parent=51 // pred_check
          %p463 = pneg %p218
        $region78: #{tpu_custom_call.1} parent=51 // pred_check_branch
          %465 = sbr.rel (%p463) target = $region80
        $region79: #{tpu_custom_call.1} parent=51 // pred_region
          %467 = dma.done [#allocation12], 2048
        $region80: #{tpu_custom_call.1} parent=51 // pred_fallthru
          _
        %s468 = sand.u32 %s43, 1
        %s469 = scalar_lea.sflag [#allocation3], %s468
        %s470 = sand.u32 %s43, 1
        %s471 = smul.addr %s470, 16
        %s472 = scalar_lea.vmem [#allocation2], %s471
        %p473 = pneg %p56
        %p474 = pneg %p53
        %s475 = sand.u32 %s35, 1
        %s476 = scalar_lea.sflag [#allocation6], %s475
        %s477 = sand.u32 %s69, 1
        %s478 = smul.addr %s477, 16
        %s479 = scalar_lea.vmem [#allocation5], %s478
        %p480 = pneg %p82
        %p481 = pneg %p79
        %s482 = sand.u32 %s35, 1
        %s483 = scalar_lea.sflag [#allocation6], %s482
        %s484 = sand.u32 %s95, 1
        %s485 = scalar_lea.vmem [#allocation7], %s484
        %p486 = pneg %p108
        %p487 = pneg %p105
        %p488 = scmp.lt.s32.totalorder %s35, 1
        %s489 = scalar_select %p488, %s35, 1
        %s490 = scalar_lea.vmem %s3, %s489
        %p491 = pneg %p134
        %p492 = pneg %p131
        %p493 = pneg %p155
        %p494 = pneg %p152
        %p495 = pneg %p176
        %p496 = pneg %p173
        %p497 = pneg %p197
        %p498 = pneg %p194
        %p499 = pneg %p218
        %p500 = pneg %p215
        %p501 = pneg %p244
        %p502 = pneg %p241
        %s503 = sand.u32 %s231, 1
        %s504 = scalar_lea.sflag [#allocation4], %s503
        %s505 = sand.u32 %s231, 1
        %s506 = smul.addr %s505, 16
        %s507 = scalar_lea.vmem [#allocation14], %s506
        %p508 = pneg %p270
        %p509 = pneg %p267
        %s510 = sand.u32 %s257, 1
        %s511 = scalar_lea.sflag [#allocation16], %s510
        %s512 = sand.u32 %s257, 1
        %s513 = smul.addr %s512, 16
        %s514 = scalar_lea.vmem [#allocation15], %s513
        %p515 = scmp.lt.s32.totalorder %s35, 1
        %s516 = scalar_select %p515, %s35, 1
        %s517 = scalar_lea.vmem %s3, %s516
        %v518 = vld [vmem:[%s423] sm:$0xff]
        %v519 = vld [vmem:[%s423 + $0x8] sm:$0xff]
        %v520 = vld [vmem:[%s433] sm:$0xff]
        %v521 = vld [vmem:[%s433 + $0x8] sm:$0xff]
        %v522 = vld [vmem:[%s442] sm:$0x1]
        %v523 = vld [vmem:[%s517] sm:$0x1]
        %vm524 = vcmask 130048
        %v526 = vsel %vm524, %v522, 0
        %528 = vmatpush.msra.mxu0 0.0
        %529 = vmatpush.msra.mxu0 0.0
        %530 = vmatpush.msra.mxu0 0.0
        %531 = vmatpush.msra.mxu0 0.0
        %532 = vmatpush.msra.mxu0 0.0
        %533 = vmatpush.msra.mxu0 0.0
        %534 = vmatpush.msra.mxu0 0.0
        %535 = vmatpush.msra.mxu0 0.0
        %536 = vmatpush.msra.mxu0 0.0
        %537 = vmatpush.msra.mxu0 0.0
        %538 = vmatpush.msra.mxu0 0.0
        %539 = vmatpush.msra.mxu0 0.0
        %540 = vmatpush.msra.mxu0 0.0
        %541 = vmatpush.msra.mxu0 0.0
        %542 = vmatpush.msra.mxu0 %v519
        %543 = vmatpush.msra.mxu0 %v518
        %544 = vmatmul.f32.gmra.mxu0 %v526
        %v545 = vpop.f32.mrf.mxu0
        %v546 = vadd.f32 0.0, %v545
        %547 = vdwg.mxu0
        %v549 = vsel %vm524, %v523, 0
        %551 = vmatpush.msra.mxu0 0.0
        %552 = vmatpush.msra.mxu0 0.0
        %553 = vmatpush.msra.mxu0 0.0
        %554 = vmatpush.msra.mxu0 0.0
        %555 = vmatpush.msra.mxu0 0.0
        %556 = vmatpush.msra.mxu0 0.0
        %557 = vmatpush.msra.mxu0 0.0
        %558 = vmatpush.msra.mxu0 0.0
        %559 = vmatpush.msra.mxu0 0.0
        %560 = vmatpush.msra.mxu0 0.0
        %561 = vmatpush.msra.mxu0 0.0
        %562 = vmatpush.msra.mxu0 0.0
        %563 = vmatpush.msra.mxu0 0.0
        %564 = vmatpush.msra.mxu0 0.0
        %565 = vmatpush.msra.mxu0 %v521
        %566 = vmatpush.msra.mxu0 %v520
        %567 = vmatmul.f32.gmra.mxu0 %v549
        %v568 = vpop.f32.mrf.mxu0
        %v569 = vadd.f32 0.0, %v568
        %570 = vdwg.mxu0
        %v571 = vld [vmem:[#allocation8] sm:$0xff]
        %v572 = vld [vmem:[#allocation8 + $0x8] sm:$0xff]
        %v573 = vld [vmem:[#allocation8 + $0x10] sm:$0xff]
        %v574 = vld [vmem:[#allocation8 + $0x18] sm:$0xff]
        %v575 = vld [vmem:[#allocation8 + $0x20] sm:$0xff]
        %v576 = vld [vmem:[#allocation8 + $0x28] sm:$0xff]
        %v577 = vld [vmem:[#allocation8 + $0x30] sm:$0xff]
        %v578 = vld [vmem:[#allocation8 + $0x38] sm:$0xff]
        %v579 = vld [vmem:[#allocation8 + $0x40] sm:$0xff]
        %v580 = vld [vmem:[#allocation8 + $0x48] sm:$0xff]
        %v581 = vld [vmem:[#allocation8 + $0x50] sm:$0xff]
        %v582 = vld [vmem:[#allocation8 + $0x58] sm:$0xff]
        %v583 = vld [vmem:[#allocation8 + $0x60] sm:$0xff]
        %v584 = vld [vmem:[#allocation8 + $0x68] sm:$0xff]
        %v585 = vld [vmem:[#allocation8 + $0x70] sm:$0xff]
        %v586 = vld [vmem:[#allocation8 + $0x78] sm:$0xff]
        %587 = vmatpush.msra.mxu0 %v586
        %588 = vmatpush.msra.mxu0 %v585
        %589 = vmatpush.msra.mxu0 %v584
        %590 = vmatpush.msra.mxu0 %v583
        %591 = vmatpush.msra.mxu0 %v582
        %592 = vmatpush.msra.mxu0 %v581
        %593 = vmatpush.msra.mxu0 %v580
        %594 = vmatpush.msra.mxu0 %v579
        %595 = vmatpush.msra.mxu0 %v578
        %596 = vmatpush.msra.mxu0 %v577
        %597 = vmatpush.msra.mxu0 %v576
        %598 = vmatpush.msra.mxu0 %v575
        %599 = vmatpush.msra.mxu0 %v574
        %600 = vmatpush.msra.mxu0 %v573
        %601 = vmatpush.msra.mxu0 %v572
        %602 = vmatpush.msra.mxu0 %v571
        %603 = vmatmul.f32.gmra.mxu0 %v518
        %v604 = vpop.f32.mrf.mxu0
        %v605 = vadd.f32 0.0, %v604
        %606 = vmatmul.f32.gmra.mxu0 %v519
        %v607 = vpop.f32.mrf.mxu0
        %v608 = vadd.f32 0.0, %v607
        %609 = vdwg.mxu0
        %v610 = vld [vmem:[#allocation11] sm:$0xff]
        %v611 = vld [vmem:[#allocation11 + $0x8] sm:$0xff]
        %v612 = vld [vmem:[#allocation11 + $0x10] sm:$0xff]
        %v613 = vld [vmem:[#allocation11 + $0x18] sm:$0xff]
        %v614 = vld [vmem:[#allocation11 + $0x20] sm:$0xff]
        %v615 = vld [vmem:[#allocation11 + $0x28] sm:$0xff]
        %v616 = vld [vmem:[#allocation11 + $0x30] sm:$0xff]
        %v617 = vld [vmem:[#allocation11 + $0x38] sm:$0xff]
        %v618 = vld [vmem:[#allocation11 + $0x40] sm:$0xff]
        %v619 = vld [vmem:[#allocation11 + $0x48] sm:$0xff]
        %v620 = vld [vmem:[#allocation11 + $0x50] sm:$0xff]
        %v621 = vld [vmem:[#allocation11 + $0x58] sm:$0xff]
        %v622 = vld [vmem:[#allocation11 + $0x60] sm:$0xff]
        %v623 = vld [vmem:[#allocation11 + $0x68] sm:$0xff]
        %v624 = vld [vmem:[#allocation11 + $0x70] sm:$0xff]
        %v625 = vld [vmem:[#allocation11 + $0x78] sm:$0xff]
        %626 = vmatpush.msra.mxu0 %v625
        %627 = vmatpush.msra.mxu0 %v624
        %628 = vmatpush.msra.mxu0 %v623
        %629 = vmatpush.msra.mxu0 %v622
        %630 = vmatpush.msra.mxu0 %v621
        %631 = vmatpush.msra.mxu0 %v620
        %632 = vmatpush.msra.mxu0 %v619
        %633 = vmatpush.msra.mxu0 %v618
        %634 = vmatpush.msra.mxu0 %v617
        %635 = vmatpush.msra.mxu0 %v616
        %636 = vmatpush.msra.mxu0 %v615
        %637 = vmatpush.msra.mxu0 %v614
        %638 = vmatpush.msra.mxu0 %v613
        %639 = vmatpush.msra.mxu0 %v612
        %640 = vmatpush.msra.mxu0 %v611
        %641 = vmatpush.msra.mxu0 %v610
        %642 = vmatmul.f32.gmra.mxu0 %v520
        %v643 = vpop.f32.mrf.mxu0
        %v644 = vadd.f32 0.0, %v643
        %645 = vmatmul.f32.gmra.mxu0 %v521
        %v646 = vpop.f32.mrf.mxu0
        %v647 = vadd.f32 0.0, %v646
        %648 = vdwg.mxu0
        %v649 = vld [vmem:[#allocation10] sm:$0xff]
        %v650 = vld [vmem:[#allocation10 + $0x8] sm:$0xff]
        %v651 = vld [vmem:[#allocation10 + $0x10] sm:$0xff]
        %v652 = vld [vmem:[#allocation10 + $0x18] sm:$0xff]
        %v653 = vld [vmem:[#allocation10 + $0x20] sm:$0xff]
        %v654 = vld [vmem:[#allocation10 + $0x28] sm:$0xff]
        %v655 = vld [vmem:[#allocation10 + $0x30] sm:$0xff]
        %v656 = vld [vmem:[#allocation10 + $0x38] sm:$0xff]
        %v657 = vld [vmem:[#allocation10 + $0x40] sm:$0xff]
        %v658 = vld [vmem:[#allocation10 + $0x48] sm:$0xff]
        %v659 = vld [vmem:[#allocation10 + $0x50] sm:$0xff]
        %v660 = vld [vmem:[#allocation10 + $0x58] sm:$0xff]
        %v661 = vld [vmem:[#allocation10 + $0x60] sm:$0xff]
        %v662 = vld [vmem:[#allocation10 + $0x68] sm:$0xff]
        %v663 = vld [vmem:[#allocation10 + $0x70] sm:$0xff]
        %v664 = vld [vmem:[#allocation10 + $0x78] sm:$0xff]
        %665 = vmatpush.msra.mxu0 %v664
        %666 = vmatpush.msra.mxu0 %v663
        %667 = vmatpush.msra.mxu0 %v662
        %668 = vmatpush.msra.mxu0 %v661
        %669 = vmatpush.msra.mxu0 %v660
        %670 = vmatpush.msra.mxu0 %v659
        %671 = vmatpush.msra.mxu0 %v658
        %672 = vmatpush.msra.mxu0 %v657
        %673 = vmatpush.msra.mxu0 %v656
        %674 = vmatpush.msra.mxu0 %v655
        %675 = vmatpush.msra.mxu0 %v654
        %676 = vmatpush.msra.mxu0 %v653
        %677 = vmatpush.msra.mxu0 %v652
        %678 = vmatpush.msra.mxu0 %v651
        %679 = vmatpush.msra.mxu0 %v650
        %680 = vmatpush.msra.mxu0 %v649
        %681 = vmatmul.f32.gmra.mxu0 %v569
        %v682 = vpop.f32.mrf.mxu0
        %v683 = vadd.f32 0.0, %v682
        %684 = vdwg.mxu0
        %v685 = vld [vmem:[#allocation13] sm:$0xff]
        %v686 = vld [vmem:[#allocation13 + $0x8] sm:$0xff]
        %v687 = vld [vmem:[#allocation13 + $0x10] sm:$0xff]
        %v688 = vld [vmem:[#allocation13 + $0x18] sm:$0xff]
        %v689 = vld [vmem:[#allocation13 + $0x20] sm:$0xff]
        %v690 = vld [vmem:[#allocation13 + $0x28] sm:$0xff]
        %v691 = vld [vmem:[#allocation13 + $0x30] sm:$0xff]
        %v692 = vld [vmem:[#allocation13 + $0x38] sm:$0xff]
        %v693 = vld [vmem:[#allocation13 + $0x40] sm:$0xff]
        %v694 = vld [vmem:[#allocation13 + $0x48] sm:$0xff]
        %v695 = vld [vmem:[#allocation13 + $0x50] sm:$0xff]
        %v696 = vld [vmem:[#allocation13 + $0x58] sm:$0xff]
        %v697 = vld [vmem:[#allocation13 + $0x60] sm:$0xff]
        %v698 = vld [vmem:[#allocation13 + $0x68] sm:$0xff]
        %v699 = vld [vmem:[#allocation13 + $0x70] sm:$0xff]
        %v700 = vld [vmem:[#allocation13 + $0x78] sm:$0xff]
        %701 = vmatpush.msra.mxu0 %v700
        %702 = vmatpush.msra.mxu0 %v699
        %703 = vmatpush.msra.mxu0 %v698
        %704 = vmatpush.msra.mxu0 %v697
        %705 = vmatpush.msra.mxu0 %v696
        %706 = vmatpush.msra.mxu0 %v695
        %707 = vmatpush.msra.mxu0 %v694
        %708 = vmatpush.msra.mxu0 %v693
        %709 = vmatpush.msra.mxu0 %v692
        %710 = vmatpush.msra.mxu0 %v691
        %711 = vmatpush.msra.mxu0 %v690
        %712 = vmatpush.msra.mxu0 %v689
        %713 = vmatpush.msra.mxu0 %v688
        %714 = vmatpush.msra.mxu0 %v687
        %715 = vmatpush.msra.mxu0 %v686
        %716 = vmatpush.msra.mxu0 %v685
        %717 = vmatmul.f32.gmra.mxu0 %v546
        %v718 = vpop.f32.mrf.mxu0
        %v719 = vadd.f32 0.0, %v718
        %720 = vdwg.mxu0
        %v721 = vperm.slane %v683, 0
        %v722 = vadd.f32 %v605, %v721
        %v723 = vadd.f32 %v608, %v721
        %v724 = vperm.slane %v719, 0
        %v725 = vadd.f32 %v644, %v724
        %v726 = vadd.f32 %v647, %v724
        %727 = vst [vmem:[%s507] sm:$0xff] %v722
        %728 = vst [vmem:[%s507 + $0x8] sm:$0xff] %v723
        %729 = vst [vmem:[%s514] sm:$0xff] %v725
        %730 = vst [vmem:[%s514 + $0x8] sm:$0xff] %v726
        %s731 = sand.u32 %s231, 1
        %s732 = scalar_lea.sflag [#allocation4], %s731
        %s733 = sand.u32 %s231, 1
        %s734 = smul.addr %s733, 16
        %s735 = scalar_lea.vmem [#allocation14], %s734
        %s736 = sand.u32 %s257, 1
        %s737 = scalar_lea.sflag [#allocation16], %s736
        %s738 = sand.u32 %s257, 1
        %s739 = smul.addr %s738, 16
        %s740 = scalar_lea.vmem [#allocation15], %s739
        // Predicated region
        $region81: #{tpu_custom_call.1} parent=51 // pred_check
          %p741 = pneg %p241
        $region82: #{tpu_custom_call.1} parent=51 // pred_check_branch
          %743 = sbr.rel (%p741) target = $region84
        $region83: #{tpu_custom_call.1} parent=51 // pred_region
          %745 = vsyncadd %s732, 0
          %s746 = smul.addr %s35, 2
          %s747 = smul.addr %s746, 8
          %s748 = scalar_lea.hbm %s8, %s747
          %s749 = sshll.u32 %s735, 4
          %s750 = int_to_ptr.vmem [resolvable:$true] %s749
          %s751 = sshll.u32 %s748, 4
          %s752 = int_to_ptr.hbm [resolvable:$true] %s751
          %757 = dma.vmem_to_hbm [thread:$0]  %s750, 256, %s752, %s732, 128, 128, 8
        $region84: #{tpu_custom_call.1} parent=51 // pred_fallthru
          _
        // Predicated region
        $region85: #{tpu_custom_call.1} parent=51 // pred_check
          %p758 = pneg %p267
        $region86: #{tpu_custom_call.1} parent=51 // pred_check_branch
          %760 = sbr.rel (%p758) target = $region88
        $region87: #{tpu_custom_call.1} parent=51 // pred_region
          %762 = vsyncadd %s737, 0
          %s763 = smul.addr %s35, 2
          %s764 = smul.addr %s763, 8
          %s765 = scalar_lea.hbm %s9, %s764
          %s766 = sshll.u32 %s740, 4
          %s767 = int_to_ptr.vmem [resolvable:$true] %s766
          %s768 = sshll.u32 %s765, 4
          %s769 = int_to_ptr.hbm [resolvable:$true] %s768
          %774 = dma.vmem_to_hbm [thread:$0]  %s767, 256, %s769, %s737, 128, 128, 8
        $region88: #{tpu_custom_call.1} parent=51 // pred_fallthru
          _
      $region52: #{tpu_custom_call.1} parent=5 // pred_fallthru
        _
      %p775 = scmp.le.s32.totalorder 2, %s30
      // Predicated region
      $region89: #{tpu_custom_call.1} parent=5 // pred_check
        %p776 = pneg %p775
      $region90: #{tpu_custom_call.1} parent=5 // pred_check_branch
        %778 = sbr.rel (%p776) target = $region92
      $region91: #{tpu_custom_call.1} parent=5 // pred_region
        %s779 = ssub.s32 %s30, 2
        // Predicated region
        $region93: #{tpu_custom_call.1} parent=91 // pred_check
          %p780 = pneg %p247
        $region94: #{tpu_custom_call.1} parent=91 // pred_check_branch
          %782 = sbr.rel (%p780) target = $region96
        $region95: #{tpu_custom_call.1} parent=91 // pred_region
          %s783 = sand.u32 %s232, 1
          %s784 = scalar_lea.sflag [#allocation4], %s783
          %s785 = sand.u32 %s232, 1
          %s786 = smul.addr %s785, 16
          %s787 = scalar_lea.vmem [#allocation14], %s786
          %789 = dma.done %s784, 256
        $region96: #{tpu_custom_call.1} parent=91 // pred_fallthru
          _
        // Predicated region
        $region97: #{tpu_custom_call.1} parent=91 // pred_check
          %p790 = pneg %p273
        $region98: #{tpu_custom_call.1} parent=91 // pred_check_branch
          %792 = sbr.rel (%p790) target = $region100
        $region99: #{tpu_custom_call.1} parent=91 // pred_region
          %s793 = sand.u32 %s258, 1
          %s794 = scalar_lea.sflag [#allocation16], %s793
          %s795 = sand.u32 %s258, 1
          %s796 = smul.addr %s795, 16
          %s797 = scalar_lea.vmem [#allocation15], %s796
          %799 = dma.done %s794, 256
        $region100: #{tpu_custom_call.1} parent=91 // pred_fallthru
          _
      $region92: #{tpu_custom_call.1} parent=5 // pred_fallthru
        _
    $region6: #{tpu_custom_call.1} parent=1 // loop_footer
      %s34 = sadd.s32 1, %s30
    $region7: #{tpu_custom_call.1} parent=1 // loop_footer_branch
      %29 = sbr.rel target = $region3
    $region8: #{tpu_custom_call.1} parent=1 // loop_exit
      _
    %800 = vsyncpa [#allocation3], 1
    %s801 = scalar_lea.sflag [#allocation3], 1
    %802 = vsyncpa %s801, 1
    %803 = vsyncpa [#allocation6], 1
    %s804 = scalar_lea.sflag [#allocation6], 1
    %805 = vsyncpa %s804, 1
    %806 = vsyncpa [#allocation9], 1
    %807 = vsyncpa [#allocation12], 1
    %808 = vsyncpa [#allocation4], 1
    %s809 = scalar_lea.sflag [#allocation4], 1
    %810 = vsyncpa %s809, 1
    %811 = vsyncpa [#allocation16], 1
    %s812 = scalar_lea.sflag [#allocation16], 1
    %813 = vsyncpa %s812, 1

</llo_original>
